<compile_context>
chip_gen: v7x
topology: tpu7x:2x2x1
jax: 0.10.0
libtpu: 0.0.40
codegen_flags: <defaults>
</compile_context>

<pallas_src>
import functools

import jax
import jax.numpy as jnp
from jax.experimental import pallas as pl
from jax.experimental.pallas import tpu as pltpu

EPS = 1e-5


# ------------------------------ Pallas kernel -------------------------------

def _bisenet_output_kernel(xp_ref, w1t_ref, b1_ref, w2_ref, o_ref, *,
                           tile_h, out_w, cin):
    """Fused 3x3 conv (BN folded) + ReLU + 1x1 conv for one (sample, row-tile).

    xp_ref : (1, Cin, H+2, W+2)   bf16 padded sample, resident across row tiles
    w1t_ref: (Cmid, 9*Cin)        bf16 BN-scaled 3x3 weights, K ordered (kh, kw, cin)
    b1_ref : (Cmid, 1)            f32  folded BN shift
    w2_ref : (Ncls, Cmid)         bf16 1x1 conv weights
    o_ref  : (1, Ncls, tile_h*W)  f32  lane-dense NCHW-flat output block
    """
    r = pl.program_id(1)
    row0 = pl.multiple_of(r * tile_h, tile_h)
    m = tile_h * out_w

    # (tile_h + 2) padded rows cover the 3x3 halo of tile_h output rows.
    win = xp_ref[0, :, pl.ds(row0, tile_h + 2), :]         # (Cin, tile_h+2, W+2)

    # Build the im2col slab with spatial on the lane axis; rows are ordered
    # (kh, kw, cin) to match the packed w1t weights.
    taps = []
    for di in range(3):
        for dj in range(3):
            taps.append(win[:, di:di + tile_h, dj:dj + out_w].reshape(cin, m))
    rhs = taps[0] if len(taps) == 1 else jnp.concatenate(taps, axis=0)  # (9*Cin, m)

    # 3x3 conv (+ folded BN scale) as ONE K=9*Cin matmul; hidden stays on-chip,
    # transposed (Cmid, m) so every activation vreg is 128-lane dense.
    h = jnp.dot(w1t_ref[...], rhs, preferred_element_type=jnp.float32)  # (Cmid, m)
    h = jnp.maximum(h + b1_ref[...], 0.0)                  # folded BN shift + ReLU

    # 1x1 conv: (Ncls, Cmid) x (Cmid, m) -> lane-dense NCHW-flat store.
    out = jnp.dot(w2_ref[...], h.astype(w2_ref.dtype),
                  preferred_element_type=jnp.float32)
    o_ref[0] = out.astype(o_ref.dtype)


# ------------------------------ helpers --------------------------------------

def _pick_tile_h(H, W, target_m=4096):
    """Largest row tile that divides H, keeps tile_h*W a multiple of 128 and
    m = tile_h*W at/under target_m lanes (falls back to the smallest valid)."""
    cands = [th for th in range(1, H + 1)
             if H % th == 0 and (th * W) % 128 == 0]
    if not cands:
        raise ValueError(f"no valid tile_h for H={H}, W={W}")
    fitting = [th for th in cands if th * W <= target_m]
    return max(fitting) if fitting else min(cands)


def _padded_vmem_bytes(shape, dtype):
    """Rough VMEM footprint of one buffer with (sublane, lane) tile padding."""
    itemsize = jnp.dtype(dtype).itemsize
    dims = [int(d) for d in shape]
    while len(dims) < 2:
        dims.insert(0, 1)
    sub_pack = 8 * (4 // itemsize)          # 8 for f32, 16 for bf16
    lead = 1
    for d in dims[:-2]:
        lead *= d
    sub = -(-dims[-2] // sub_pack) * sub_pack
    lane = -(-dims[-1] // 128) * 128
    return lead * sub * lane * itemsize


# --------------------------------- wrapper ----------------------------------

def bisenet_output_forward(x_nchw, w1_oihw, bn_params, w2_oihw, *, tile_h=None):
    """x: (B, Cin, H, W) f32 -> (B, Ncls, H, W) f32 (PyTorch NCHW layout)."""
    gamma, beta, run_mean, run_var = bn_params
    B, cin, H, W = x_nchw.shape
    cmid = w1_oihw.shape[0]
    ncls = w2_oihw.shape[0]
    if tile_h is None:
        tile_h = _pick_tile_h(H, W)
    assert H % tile_h == 0 and (tile_h * W) % 128 == 0, \
        "choose tile_h so that H % tile_h == 0 and tile_h*W is a multiple of 128"

    bf16 = jnp.bfloat16
    # Fold inference-mode BatchNorm into the bias-free 3x3 conv.
    scale = gamma * jax.lax.rsqrt(run_var + EPS)                        # (Cmid,)
    w1t = (jnp.transpose(w1_oihw, (0, 2, 3, 1)).reshape(cmid, 9 * cin)  # (Cmid, kh*kw*Cin)
           * scale[:, None]).astype(bf16)
    b1 = (beta - run_mean * scale).reshape(cmid, 1)                     # f32 shift
    w2 = w2_oihw.reshape(ncls, cmid).astype(bf16)                       # (Ncls, Cmid)

    # Channel-major (== NCHW) padded input; only the zero-pad stays wrapper-side.
    xp = jnp.pad(x_nchw.astype(bf16), ((0, 0), (0, 0), (1, 1), (1, 1)))

    n_tiles = H // tile_h
    m = tile_h * W
    kernel = functools.partial(_bisenet_output_kernel,
                               tile_h=tile_h, out_w=W, cin=cin)

    # Advisory cost estimate for the whole call.
    flops = 2 * B * H * W * (9 * cin * cmid + cmid * ncls)
    bytes_accessed = (xp.size * 2 + w1t.size * 2 + b1.size * 4 + w2.size * 2
                      + B * ncls * H * W * 4)
    cost = pl.CostEstimate(flops=int(flops), transcendentals=0,
                           bytes_accessed=int(bytes_accessed))

    # Scoped VMEM: cover double-buffered blocks + weights + in-kernel temps.
    est = (2 * _padded_vmem_bytes((1, cin, H + 2, W + 2), bf16)
           + 2 * _padded_vmem_bytes((1, ncls, m), jnp.float32)
           + _padded_vmem_bytes((cmid, 9 * cin), bf16)
           + _padded_vmem_bytes((cmid, 1), jnp.float32)
           + _padded_vmem_bytes((ncls, cmid), bf16)
           + _padded_vmem_bytes((9 * cin, m), bf16)          # im2col slab
           + 2 * _padded_vmem_bytes((cmid, m), jnp.float32)  # hidden + temps
           + (4 << 20))
    vmem_limit = int(min(max(est, 32 << 20), 64 << 20))

    out = pl.pallas_call(
        kernel,
        out_shape=jax.ShapeDtypeStruct((B, ncls, H * W), jnp.float32),
        grid=(B, n_tiles),
        in_specs=[
            # Constant block index across the row-tile axis -> each padded
            # sample is DMA'd once and stays VMEM-resident across row tiles.
            pl.BlockSpec((1, cin, H + 2, W + 2), lambda b, r: (b, 0, 0, 0)),
            pl.BlockSpec((cmid, 9 * cin), lambda b, r: (0, 0)),
            pl.BlockSpec((cmid, 1), lambda b, r: (0, 0)),
            pl.BlockSpec((ncls, cmid), lambda b, r: (0, 0)),
        ],
        out_specs=pl.BlockSpec((1, ncls, m), lambda b, r: (b, 0, r)),
        compiler_params=pltpu.CompilerParams(
            # Batch carries the megacore split (v7x): each core streams its
            # samples once; row tiles run sequentially over the resident sample.
            dimension_semantics=("parallel", "arbitrary"),
            vmem_limit_bytes=vmem_limit),
        cost_estimate=cost,
    )(xp, w1t, b1, w2)
    return out.reshape(B, ncls, H, W)


# ------------------------------ pure-JAX reference --------------------------

def _reference(x_nchw, w1_oihw, bn_params, w2_oihw):
    gamma, beta, run_mean, run_var = bn_params
    dn = ("NCHW", "OIHW", "NCHW")
    y = jax.lax.conv_general_dilated(x_nchw, w1_oihw, (1, 1), ((1, 1), (1, 1)),
                                     dimension_numbers=dn)
    y = ((y - run_mean[None, :, None, None])
         * jax.lax.rsqrt(run_var[None, :, None, None] + EPS)
         * gamma[None, :, None, None] + beta[None, :, None, None])
    y = jnp.maximum(y, 0.0)
    return jax.lax.conv_general_dilated(y, w2_oihw, (1, 1), ((0, 0), (0, 0)),
                                        dimension_numbers=dn)


# ----------------------------------- main ------------------------------------

if __name__ == "__main__":
    key = jax.random.PRNGKey(0)
    k_x, k_w1, k_w2, k_g, k_b, k_m, k_v = jax.random.split(key, 7)

    B, CIN, CMID, NCLS, H, W = 2, 8, 32, 16, 16, 16
    x = jax.random.normal(k_x, (B, CIN, H, W), jnp.float32)
    w1 = 0.1 * jax.random.normal(k_w1, (CMID, CIN, 3, 3), jnp.float32)   # OIHW, bias=False
    w2 = 0.1 * jax.random.normal(k_w2, (NCLS, CMID, 1, 1), jnp.float32)  # 1x1,  bias=False
    bn = (1.0 + 0.1 * jax.random.normal(k_g, (CMID,), jnp.float32),      # gamma
          0.1 * jax.random.normal(k_b, (CMID,), jnp.float32),            # beta
          0.1 * jax.random.normal(k_m, (CMID,), jnp.float32),            # running_mean
          jax.random.uniform(k_v, (CMID,), jnp.float32, 0.5, 1.5))       # running_var

    out = bisenet_output_forward(x, w1, bn, w2)
    out = jax.block_until_ready(out)
    assert out.shape == (B, NCLS, H, W) and out.dtype == jnp.float32

    ref = _reference(x, w1, bn, w2)
    err = float(jnp.max(jnp.abs(out - ref)))
    # Tolerance sized for bf16 matmul operands with f32 accumulation
    # (estimated max rounding error ~1e-2 at these shapes); a layout or
    # indexing bug would produce O(0.3) errors and is still caught.
    assert err < 3e-2, f"mismatch vs reference: max abs err = {err}"
    print("KERNEL_OK")
</pallas_src>

<mosaic_0001>
module attributes {stable_mosaic.version = 11 : i64} {
  func.func @_bisenet_output_kernel(%arg0: i32, %arg1: i32, %arg2: memref<1x8x18x18xbf16, #tpu.memory_space<vmem>>, %arg3: memref<32x72xbf16, #tpu.memory_space<vmem>>, %arg4: memref<32x1xf32, #tpu.memory_space<vmem>>, %arg5: memref<16x32xbf16, #tpu.memory_space<vmem>>, %arg6: memref<1x16x256xf32, #tpu.memory_space<vmem>>) attributes {dimension_semantics = [#tpu.dimension_semantics<parallel>, #tpu.dimension_semantics<arbitrary>], iteration_bounds = array<i64: 2, 1>, scalar_prefetch = 0 : i64, scratch_operands = 0 : i64, tpu.core_type = #tpu.core_type<tc>, window_params = [{transform_indices = @transform_0, window_bounds = array<i64: 1, 8, 18, 18>}, {pipeline_mode = #tpu.pipeline_mode<synchronous>, transform_indices = @transform_1, window_bounds = array<i64: 32, 72>}, {pipeline_mode = #tpu.pipeline_mode<synchronous>, transform_indices = @transform_2, window_bounds = array<i64: 32, 1>}, {pipeline_mode = #tpu.pipeline_mode<synchronous>, transform_indices = @transform_3, window_bounds = array<i64: 16, 32>}, {transform_indices = @transform_4, window_bounds = array<i64: 1, 16, 256>}]} {
    %c16_i32 = arith.constant 16 : i32
    %0 = arith.muli %arg1, %c16_i32 : i32
    %1 = tpu.assume_multiple %0, 16 : i32
    %c0 = arith.constant 0 : index
    %c0_0 = arith.constant 0 : index
    %2 = arith.index_cast %1 : i32 to index
    %c0_1 = arith.constant 0 : index
    %3 = vector.load %arg2[%c0, %c0_0, %2, %c0_1] : memref<1x8x18x18xbf16, #tpu.memory_space<vmem>>, vector<1x8x18x18xbf16>
    %4 = vector.shape_cast %3 : vector<1x8x18x18xbf16> to vector<8x18x18xbf16>
    %5 = vector.extract_strided_slice %4 {offsets = [0, 0, 0], sizes = [8, 16, 16], strides = [1, 1, 1]} : vector<8x18x18xbf16> to vector<8x16x16xbf16>
    %6 = vector.shape_cast %5 : vector<8x16x16xbf16> to vector<8x256xbf16>
    %7 = vector.extract_strided_slice %4 {offsets = [0, 0, 1], sizes = [8, 16, 16], strides = [1, 1, 1]} : vector<8x18x18xbf16> to vector<8x16x16xbf16>
    %8 = vector.shape_cast %7 : vector<8x16x16xbf16> to vector<8x256xbf16>
    %9 = vector.extract_strided_slice %4 {offsets = [0, 0, 2], sizes = [8, 16, 16], strides = [1, 1, 1]} : vector<8x18x18xbf16> to vector<8x16x16xbf16>
    %10 = vector.shape_cast %9 : vector<8x16x16xbf16> to vector<8x256xbf16>
    %11 = vector.extract_strided_slice %4 {offsets = [0, 1, 0], sizes = [8, 16, 16], strides = [1, 1, 1]} : vector<8x18x18xbf16> to vector<8x16x16xbf16>
    %12 = vector.shape_cast %11 : vector<8x16x16xbf16> to vector<8x256xbf16>
    %13 = vector.extract_strided_slice %4 {offsets = [0, 1, 1], sizes = [8, 16, 16], strides = [1, 1, 1]} : vector<8x18x18xbf16> to vector<8x16x16xbf16>
    %14 = vector.shape_cast %13 : vector<8x16x16xbf16> to vector<8x256xbf16>
    %15 = vector.extract_strided_slice %4 {offsets = [0, 1, 2], sizes = [8, 16, 16], strides = [1, 1, 1]} : vector<8x18x18xbf16> to vector<8x16x16xbf16>
    %16 = vector.shape_cast %15 : vector<8x16x16xbf16> to vector<8x256xbf16>
    %17 = vector.extract_strided_slice %4 {offsets = [0, 2, 0], sizes = [8, 16, 16], strides = [1, 1, 1]} : vector<8x18x18xbf16> to vector<8x16x16xbf16>
    %18 = vector.shape_cast %17 : vector<8x16x16xbf16> to vector<8x256xbf16>
    %19 = vector.extract_strided_slice %4 {offsets = [0, 2, 1], sizes = [8, 16, 16], strides = [1, 1, 1]} : vector<8x18x18xbf16> to vector<8x16x16xbf16>
    %20 = vector.shape_cast %19 : vector<8x16x16xbf16> to vector<8x256xbf16>
    %21 = vector.extract_strided_slice %4 {offsets = [0, 2, 2], sizes = [8, 16, 16], strides = [1, 1, 1]} : vector<8x18x18xbf16> to vector<8x16x16xbf16>
    %22 = vector.shape_cast %21 : vector<8x16x16xbf16> to vector<8x256xbf16>
    %23 = tpu.concatenate %6, %8, %10, %12, %14, %16, %18, %20, %22 in 0 : vector<8x256xbf16>, vector<8x256xbf16>, vector<8x256xbf16>, vector<8x256xbf16>, vector<8x256xbf16>, vector<8x256xbf16>, vector<8x256xbf16>, vector<8x256xbf16>, vector<8x256xbf16> -> vector<72x256xbf16>
    %c0_2 = arith.constant 0 : index
    %c0_3 = arith.constant 0 : index
    %24 = vector.load %arg3[%c0_2, %c0_3] : memref<32x72xbf16, #tpu.memory_space<vmem>>, vector<32x72xbf16>
    %cst = arith.constant dense<0.000000e+00> : vector<32x256xf32>
    %25 = tpu.matmul %24, %23, %cst {dimension_numbers = #tpu.dot_dimension_numbers<[1], [0], [0], [1], [0, 0, 1, 1], [], []>} : vector<32x72xbf16>, vector<72x256xbf16>, vector<32x256xf32> -> vector<32x256xf32>
    %c0_4 = arith.constant 0 : index
    %c0_5 = arith.constant 0 : index
    %26 = vector.load %arg4[%c0_4, %c0_5] : memref<32x1xf32, #tpu.memory_space<vmem>>, vector<32x1xf32>
    %27 = vector.broadcast %26 : vector<32x1xf32> to vector<32x256xf32>
    %28 = arith.addf %25, %27 : vector<32x256xf32>
    %cst_6 = arith.constant 0.000000e+00 : f32
    %29 = vector.broadcast %cst_6 : f32 to vector<32x256xf32>
    %30 = arith.maximumf %28, %29 : vector<32x256xf32>
    %c0_7 = arith.constant 0 : index
    %c0_8 = arith.constant 0 : index
    %31 = vector.load %arg5[%c0_7, %c0_8] : memref<16x32xbf16, #tpu.memory_space<vmem>>, vector<16x32xbf16>
    %32 = arith.truncf %30 : vector<32x256xf32> to vector<32x256xbf16>
    %cst_9 = arith.constant dense<0.000000e+00> : vector<16x256xf32>
    %33 = tpu.matmul %31, %32, %cst_9 {dimension_numbers = #tpu.dot_dimension_numbers<[1], [0], [0], [1], [0, 0, 1, 1], [], []>} : vector<16x32xbf16>, vector<32x256xbf16>, vector<16x256xf32> -> vector<16x256xf32>
    %c0_10 = arith.constant 0 : index
    %c0_11 = arith.constant 0 : index
    %c0_12 = arith.constant 0 : index
    %34 = vector.load %arg6[%c0_10, %c0_11, %c0_12] : memref<1x16x256xf32, #tpu.memory_space<vmem>>, vector<1x16x256xf32>
    %35 = vector.shape_cast %34 : vector<1x16x256xf32> to vector<16x256xf32>
    %36 = vector.shape_cast %33 : vector<16x256xf32> to vector<1x16x256xf32>
    tpu.vector_store %arg6[%c0_10, %c0_11, %c0_12], %36 {strides = array<i32>} : memref<1x16x256xf32, #tpu.memory_space<vmem>>, vector<1x16x256xf32>,
    return
  }
  func.func @transform_0(%arg0: i32, %arg1: i32) -> (i32, i32, i32, i32) {
    %c0_i32 = arith.constant 0 : i32
    %c0_i32_0 = arith.constant 0 : i32
    %c0_i32_1 = arith.constant 0 : i32
    %c0_i32_2 = arith.constant 0 : i32
    return %arg0, %c0_i32, %c0_i32_0, %c0_i32_1 : i32, i32, i32, i32
  }
  func.func @transform_1(%arg0: i32, %arg1: i32) -> (i32, i32) {
    %c0_i32 = arith.constant 0 : i32
    %c0_i32_0 = arith.constant 0 : i32
    %c0_i32_1 = arith.constant 0 : i32
    return %c0_i32, %c0_i32_0 : i32, i32
  }
  func.func @transform_2(%arg0: i32, %arg1: i32) -> (i32, i32) {
    %c0_i32 = arith.constant 0 : i32
    %c0_i32_0 = arith.constant 0 : i32
    %c0_i32_1 = arith.constant 0 : i32
    return %c0_i32, %c0_i32_0 : i32, i32
  }
  func.func @transform_3(%arg0: i32, %arg1: i32) -> (i32, i32) {
    %c0_i32 = arith.constant 0 : i32
    %c0_i32_0 = arith.constant 0 : i32
    %c0_i32_1 = arith.constant 0 : i32
    return %c0_i32, %c0_i32_0 : i32, i32
  }
  func.func @transform_4(%arg0: i32, %arg1: i32) -> (i32, i32, i32) {
    %c0_i32 = arith.constant 0 : i32
    %c0_i32_0 = arith.constant 0 : i32
    return %arg0, %c0_i32, %arg1 : i32, i32, i32
  }
}

</mosaic_0001>

<llo_original>
// kernel: tpu_custom_call.1
$region0: #{tpu_custom_call.1}
  #allocation0 [shape = 'u32[]', space=smem, size = 0x4, offset = 0x4, fixed_abs, tag = 'smem constant byte address 0x4 - core index']
  #allocation1 [shape = 'u32[144,128]{1,0:T(1,128)}', space=vmem, size = 0x12000, scoped, tag = 'internal scratch']
  %s0 = inlined_call_operand.vmem [shape: bf16[2,8,18,18], index: 0, kind: input, shape index: {}]
  %s1 = inlined_call_operand.vmem [shape: bf16[32,72], index: 1, kind: input, shape index: {}]
  %s2 = inlined_call_operand.vmem [shape: f32[32,1], index: 2, kind: input, shape index: {}]
  %s3 = inlined_call_operand.vmem [shape: bf16[16,32], index: 3, kind: input, shape index: {}]
  %s4 = inlined_call_operand.hbm [shape: f32[2,16,256], index: 4, kind: output, shape index: {}]
  %s5 = sld [smem:[#allocation0]]
  $region49: #{tpu_custom_call.1} parent=0
    _
  %s7 = ssub.s32 1, %s5
  %s8 = scalar_select 0, %s7, %s5
  $region1: #{tpu_custom_call.1} parent=0
    #allocation2 [shape = 'u8[32768]{0}', space=vmem, size = 0x8000, scoped, tag = 'output window, operand 0']
    #allocation3 [shape = 's32[2]{0}', space=sflag, size = 0x8, scoped, tag = 'scoped memory for tpu_custom_call.1']
    %9 = vsyncpa [#allocation3], 0
    %s10 = scalar_lea.sflag [#allocation3], 1
    %11 = vsyncpa %s10, 0
    loop: start=0, step=1, limit=4
    $region2: #{tpu_custom_call.1} parent=1 // loop_pre_header
      _
    $region3: #{tpu_custom_call.1} parent=1 // loop_header
      %s13 = sphi 0, %s17
      %p14 = scmp.ge.s32.totalorder %s13, 4
      %s20 = sphi 0, %s32
      %s21 = sphi 0, %s28
      %s22 = sphi 0, %s20
      %s23 = sphi 0, %s21
      %s24 = sphi 0, %s22
      %s25 = sphi 0, %s23
      %s35 = sphi 0, %s37
      %s38 = sphi 0, %s35
      %s39 = sphi 0, %s38
      %s55 = sphi 0, %s39
      %s59 = sphi 0, %s59
      %s61 = sphi 0, %s59
      %s62 = sphi 0, %s61
      %s76 = sphi 0, %s62
      %s80 = sphi 0, %s80
      %s82 = sphi 0, %s80
      %s83 = sphi 0, %s82
      %s97 = sphi 0, %s83
      %s101 = sphi 0, %s101
      %s103 = sphi 0, %s101
      %s104 = sphi 0, %s103
      %s118 = sphi 0, %s104
      %s126 = sphi 0, %s128
      %s129 = sphi 0, %s126
      %s130 = sphi 0, %s129
      %s146 = sphi 0, %s130
    $region4: #{tpu_custom_call.1} parent=1 // loop_header_branch
      %16 = sbr.rel (%p14) target = $region8
    $region5: #{tpu_custom_call.1} parent=1 // loop_body
      %s18 = ssub.s32 %s13, 1
      %s19 = ssub.s32 %s13, 2
      %s26 = sadd.s32 1, %s21
      %p27 = scmp.ge.s32.totalorder %s26, 1
      %s28 = scalar_select %p27, 0, %s26
      %s29 = sadd.s32 1, %s20
      %s30 = scalar_select %p27, %s29, %s20
      %p31 = scmp.ge.s32.totalorder %s30, 2
      %s32 = scalar_select %p31, 0, %s30
      %s33 = ssub.s32 %s20, %s32
      %p34 = scmp.eq.s32.totalorder %s33, 0
      %s36 = sadd.s32 %s35, 1
      %s37 = scalar_select %p34, %s35, %s36
      %p40 = pneg %p34
      %p41 = scmp.eq.s32.totalorder %s13, 1
      %p42 = por %p40, %p41
      %p43 = scmp.ne.s32.totalorder %s35, %s38
      %p44 = scmp.eq.s32.totalorder %s13, 0
      %p45 = por %p43, %p44
      %p46 = scmp.ne.s32.totalorder %s35, %s38
      %p47 = scmp.eq.s32.totalorder %s18, 1
      %p48 = por %p46, %p47
      %p49 = scmp.ne.s32.totalorder %s38, %s39
      %p50 = scmp.eq.s32.totalorder %s18, 0
      %p51 = por %p49, %p50
      %p52 = scmp.ne.s32.totalorder %s38, %s39
      %p53 = scmp.eq.s32.totalorder %s19, 1
      %p54 = por %p52, %p53
      %p56 = scmp.ne.s32.totalorder %s39, %s55
      %p57 = scmp.eq.s32.totalorder %s19, 0
      %p58 = por %p56, %p57
      %s60 = sadd.s32 %s59, 1
      %p63 = scmp.eq.s32.totalorder %s13, 1
      %p64 = scmp.ne.s32.totalorder %s59, %s61
      %p65 = scmp.eq.s32.totalorder %s13, 0
      %p66 = por %p64, %p65
      %p67 = scmp.ne.s32.totalorder %s59, %s61
      %p68 = scmp.eq.s32.totalorder %s18, 1
      %p69 = por %p67, %p68
      %p70 = scmp.ne.s32.totalorder %s61, %s62
      %p71 = scmp.eq.s32.totalorder %s18, 0
      %p72 = por %p70, %p71
      %p73 = scmp.ne.s32.totalorder %s61, %s62
      %p74 = scmp.eq.s32.totalorder %s19, 1
      %p75 = por %p73, %p74
      %p77 = scmp.ne.s32.totalorder %s62, %s76
      %p78 = scmp.eq.s32.totalorder %s19, 0
      %p79 = por %p77, %p78
      %s81 = sadd.s32 %s80, 1
      %p84 = scmp.eq.s32.totalorder %s13, 1
      %p85 = scmp.ne.s32.totalorder %s80, %s82
      %p86 = scmp.eq.s32.totalorder %s13, 0
      %p87 = por %p85, %p86
      %p88 = scmp.ne.s32.totalorder %s80, %s82
      %p89 = scmp.eq.s32.totalorder %s18, 1
      %p90 = por %p88, %p89
      %p91 = scmp.ne.s32.totalorder %s82, %s83
      %p92 = scmp.eq.s32.totalorder %s18, 0
      %p93 = por %p91, %p92
      %p94 = scmp.ne.s32.totalorder %s82, %s83
      %p95 = scmp.eq.s32.totalorder %s19, 1
      %p96 = por %p94, %p95
      %p98 = scmp.ne.s32.totalorder %s83, %s97
      %p99 = scmp.eq.s32.totalorder %s19, 0
      %p100 = por %p98, %p99
      %s102 = sadd.s32 %s101, 1
      %p105 = scmp.eq.s32.totalorder %s13, 1
      %p106 = scmp.ne.s32.totalorder %s101, %s103
      %p107 = scmp.eq.s32.totalorder %s13, 0
      %p108 = por %p106, %p107
      %p109 = scmp.ne.s32.totalorder %s101, %s103
      %p110 = scmp.eq.s32.totalorder %s18, 1
      %p111 = por %p109, %p110
      %p112 = scmp.ne.s32.totalorder %s103, %s104
      %p113 = scmp.eq.s32.totalorder %s18, 0
      %p114 = por %p112, %p113
      %p115 = scmp.ne.s32.totalorder %s103, %s104
      %p116 = scmp.eq.s32.totalorder %s19, 1
      %p117 = por %p115, %p116
      %p119 = scmp.ne.s32.totalorder %s104, %s118
      %p120 = scmp.eq.s32.totalorder %s19, 0
      %p121 = por %p119, %p120
      %s122 = ssub.s32 %s20, %s32
      %s123 = ssub.s32 %s21, %s28
      %s124 = sor.u32 %s122, %s123
      %p125 = scmp.eq.s32.totalorder %s124, 0
      %s127 = sadd.s32 %s126, 1
      %s128 = scalar_select %p125, %s126, %s127
      %p131 = pneg %p125
      %p132 = scmp.eq.s32.totalorder %s13, 1
      %p133 = por %p131, %p132
      %p134 = scmp.ne.s32.totalorder %s126, %s129
      %p135 = scmp.eq.s32.totalorder %s13, 0
      %p136 = por %p134, %p135
      %p137 = scmp.ne.s32.totalorder %s126, %s129
      %p138 = scmp.eq.s32.totalorder %s18, 1
      %p139 = por %p137, %p138
      %p140 = scmp.ne.s32.totalorder %s129, %s130
      %p141 = scmp.eq.s32.totalorder %s18, 0
      %p142 = por %p140, %p141
      %p143 = scmp.ne.s32.totalorder %s129, %s130
      %p144 = scmp.eq.s32.totalorder %s19, 1
      %p145 = por %p143, %p144
      %p147 = scmp.ne.s32.totalorder %s130, %s146
      %p148 = scmp.eq.s32.totalorder %s19, 0
      %p149 = por %p147, %p148
      %p150 = scmp.le.s32.totalorder 1, %s13
      %p151 = scmp.lt.s32.totalorder %s13, 3
      %p152 = pnand %p150, %p151
      %p153 = pneg %p152
      // Predicated region
      $region9: #{tpu_custom_call.1} parent=5 // pred_check
        _
      $region10: #{tpu_custom_call.1} parent=5 // pred_check_branch
        %155 = sbr.rel (%p152) target = $region12
      $region11: #{tpu_custom_call.1} parent=5 // pred_region
        %s156 = ssub.s32 %s13, 1
        // Predicated region
        $region13: #{tpu_custom_call.1} parent=11 // pred_check
          %p157 = pneg %p72
        $region14: #{tpu_custom_call.1} parent=11 // pred_check_branch
          %159 = sbr.rel (%p157) target = $region16
        $region15: #{tpu_custom_call.1} parent=11 // pred_region
          _
        $region16: #{tpu_custom_call.1} parent=11 // pred_fallthru
          _
        // Predicated region
        $region17: #{tpu_custom_call.1} parent=11 // pred_check
          %p160 = pneg %p93
        $region18: #{tpu_custom_call.1} parent=11 // pred_check_branch
          %162 = sbr.rel (%p160) target = $region20
        $region19: #{tpu_custom_call.1} parent=11 // pred_region
          _
        $region20: #{tpu_custom_call.1} parent=11 // pred_fallthru
          _
        // Predicated region
        $region21: #{tpu_custom_call.1} parent=11 // pred_check
          %p163 = pneg %p114
        $region22: #{tpu_custom_call.1} parent=11 // pred_check_branch
          %165 = sbr.rel (%p163) target = $region24
        $region23: #{tpu_custom_call.1} parent=11 // pred_region
          _
        $region24: #{tpu_custom_call.1} parent=11 // pred_fallthru
          _
      $region12: #{tpu_custom_call.1} parent=5 // pred_fallthru
        _
      %p166 = scmp.lt.s32.totalorder %s13, 2
      // Predicated region
      $region25: #{tpu_custom_call.1} parent=5 // pred_check
        %p167 = pneg %p166
      $region26: #{tpu_custom_call.1} parent=5 // pred_check_branch
        %169 = sbr.rel (%p167) target = $region28
      $region27: #{tpu_custom_call.1} parent=5 // pred_region
        // Predicated region
        $region29: #{tpu_custom_call.1} parent=27 // pred_check
          %p170 = pneg %p45
        $region30: #{tpu_custom_call.1} parent=27 // pred_check_branch
          %172 = sbr.rel (%p170) target = $region32
        $region31: #{tpu_custom_call.1} parent=27 // pred_region
          %p173 = scmp.lt.s32.totalorder %s20, 1
          %s174 = scalar_select %p173, %s20, 1
          %s175 = smul.addr %s174, 24
          %s176 = smul.addr %s175, 4
          %s177 = scalar_lea.vmem %s0, %s176
        $region32: #{tpu_custom_call.1} parent=27 // pred_fallthru
          _
      $region28: #{tpu_custom_call.1} parent=5 // pred_fallthru
        _
      %p178 = scmp.le.s32.totalorder 1, %s13
      %p179 = scmp.lt.s32.totalorder %s13, 3
      %p180 = pnand %p178, %p179
      %p181 = pneg %p180
      // Predicated region
      $region33: #{tpu_custom_call.1} parent=5 // pred_check
        _
      $region34: #{tpu_custom_call.1} parent=5 // pred_check_branch
        %183 = sbr.rel (%p180) target = $region36
      $region35: #{tpu_custom_call.1} parent=5 // pred_region
        %s184 = ssub.s32 %s13, 1
        %p185 = scmp.lt.s32.totalorder %s22, 1
        %s186 = scalar_select %p185, %s22, 1
        %s187 = smul.addr %s186, 24
        %s188 = smul.addr %s187, 4
        %s189 = scalar_lea.vmem %s0, %s188
        %p190 = pneg %p51
        %p191 = pneg %p48
        %p192 = pneg %p72
        %p193 = pneg %p69
        %p194 = pneg %p93
        %p195 = pneg %p90
        %p196 = pneg %p114
        %p197 = pneg %p111
        %p198 = pneg %p142
        %p199 = pneg %p139
        %s200 = sand.u32 %s129, 1
        %s201 = scalar_lea.sflag [#allocation3], %s200
        %s202 = sand.u32 %s129, 1
        %s203 = smul.addr %s202, 32
        %s204 = scalar_lea.vmem [#allocation2], %s203
        %p205 = scmp.lt.s32.totalorder %s22, 1
        %s206 = scalar_select %p205, %s22, 1
        %s207 = smul.addr %s206, 24
        %s208 = smul.addr %s207, 4
        %s209 = scalar_lea.vmem %s0, %s208
        %s210 = smul.u32 2, %s23
        %s212 = smul.u32 %s23, 16
        %s213 = sshra.s32 %s212, 3
        %s214 = sand.u32 %s212, 7
        %s215 = smul.addr %s213, 4
        %s216 = scalar_lea.vmem %s209, %s215
        %v217 = vld [vmem:[%s216] sm:$0xf]
        %v218 = vld [vmem:[%s216 + $0x4] sm:$0xf]
        %v219 = vld [vmem:[%s216 + $0x8] sm:$0x1]
        %v220 = vld [vmem:[%s216 + $0xc] sm:$0xf]
        %v221 = vld [vmem:[%s216 + $0x10] sm:$0xf]
        %v222 = vld [vmem:[%s216 + $0x14] sm:$0x1]
        %v223 = vld [vmem:[%s216 + $0x18] sm:$0xf]
        %v224 = vld [vmem:[%s216 + $0x1c] sm:$0xf]
        %v225 = vld [vmem:[%s216 + $0x20] sm:$0x1]
        %v226 = vld [vmem:[%s216 + $0x24] sm:$0xf]
        %v227 = vld [vmem:[%s216 + $0x28] sm:$0xf]
        %v228 = vld [vmem:[%s216 + $0x2c] sm:$0x1]
        %v229 = vld [vmem:[%s216 + $0x30] sm:$0xf]
        %v230 = vld [vmem:[%s216 + $0x34] sm:$0xf]
        %v231 = vld [vmem:[%s216 + $0x38] sm:$0x1]
        %v232 = vld [vmem:[%s216 + $0x3c] sm:$0xf]
        %v233 = vld [vmem:[%s216 + $0x40] sm:$0xf]
        %v234 = vld [vmem:[%s216 + $0x44] sm:$0x1]
        %v235 = vld [vmem:[%s216 + $0x48] sm:$0xf]
        %v236 = vld [vmem:[%s216 + $0x4c] sm:$0xf]
        %v237 = vld [vmem:[%s216 + $0x50] sm:$0x1]
        %v238 = vld [vmem:[%s216 + $0x54] sm:$0xf]
        %v239 = vld [vmem:[%s216 + $0x58] sm:$0xf]
        %v240 = vld [vmem:[%s216 + $0x5c] sm:$0x1]
        %v241 = vcombine.low %v217, %v229
        %v243 = vunpack.c.l.s4 1983009808
        %v244 = vunpack.c.0.s8 %v243
        %v245 = vlaneseq
        %v246 = vshrl.u32 %v245, 7
        %v247 = vsub.s32 %v244, %v246
        %v248 = vrot.slane %v241, %v247
        %v249 = vcombine.low %v223, %v235
        %v251 = vunpack.c.l.s4 1983009808
        %v252 = vunpack.c.0.s8 %v251
        %v253 = vlaneseq
        %v254 = vshrl.u32 %v253, 7
        %v255 = vsub.s32 %v252, %v254
        %v256 = vrot.slane %v249, %v255
        %v257 = vcombine.low %v248, %v256
        %v258 = vcombine.high %v248, %v256
        %v260 = vunpack.c.l.s4 1934713408
        %v261 = vunpack.c.0.s8 %v260
        %v262 = vlaneseq
        %v263 = vshrl.u32 %v262, 7
        %v264 = vsub.s32 %v261, %v263
        %v265 = vrot.slane %v257, %v264
        %v267 = vunpack.c.l.s4 1934713408
        %v268 = vunpack.c.0.s8 %v267
        %v269 = vlaneseq
        %v270 = vshrl.u32 %v269, 7
        %v271 = vsub.s32 %v268, %v270
        %v272 = vrot.slane %v258, %v271
        %v273 = vcombine.high %v265, 0
        %v274 = vcombine.high %v272, 0
        %v275 = vcombine.low %v220, %v232
        %v277 = vunpack.c.l.s4 1983009808
        %v278 = vunpack.c.0.s8 %v277
        %v279 = vlaneseq
        %v280 = vshrl.u32 %v279, 7
        %v281 = vsub.s32 %v278, %v280
        %v282 = vrot.slane %v275, %v281
        %v283 = vcombine.low %v226, %v238
        %v285 = vunpack.c.l.s4 1983009808
        %v286 = vunpack.c.0.s8 %v285
        %v287 = vlaneseq
        %v288 = vshrl.u32 %v287, 7
        %v289 = vsub.s32 %v286, %v288
        %v290 = vrot.slane %v283, %v289
        %v291 = vcombine.low %v282, %v290
        %v292 = vcombine.high %v282, %v290
        %v294 = vunpack.c.l.s4 1934713408
        %v295 = vunpack.c.0.s8 %v294
        %v296 = vlaneseq
        %v297 = vshrl.u32 %v296, 7
        %v298 = vsub.s32 %v295, %v297
        %v299 = vrot.slane %v291, %v298
        %v301 = vunpack.c.l.s4 1934713408
        %v302 = vunpack.c.0.s8 %v301
        %v303 = vlaneseq
        %v304 = vshrl.u32 %v303, 7
        %v305 = vsub.s32 %v302, %v304
        %v306 = vrot.slane %v292, %v305
        %v307 = vcombine.high %v299, 0
        %v308 = vcombine.high %v306, 0
        %v309 = vcombine.low %v218, %v230
        %v311 = vunpack.c.l.s4 1983009808
        %v312 = vunpack.c.0.s8 %v311
        %v313 = vlaneseq
        %v314 = vshrl.u32 %v313, 7
        %v315 = vsub.s32 %v312, %v314
        %v316 = vrot.slane %v309, %v315
        %v317 = vcombine.low %v224, %v236
        %v319 = vunpack.c.l.s4 1983009808
        %v320 = vunpack.c.0.s8 %v319
        %v321 = vlaneseq
        %v322 = vshrl.u32 %v321, 7
        %v323 = vsub.s32 %v320, %v322
        %v324 = vrot.slane %v317, %v323
        %v325 = vcombine.low %v316, %v324
        %v326 = vcombine.high %v316, %v324
        %v328 = vunpack.c.l.s4 1934713408
        %v329 = vunpack.c.0.s8 %v328
        %v330 = vlaneseq
        %v331 = vshrl.u32 %v330, 7
        %v332 = vsub.s32 %v329, %v331
        %v333 = vrot.slane %v325, %v332
        %v335 = vunpack.c.l.s4 1934713408
        %v336 = vunpack.c.0.s8 %v335
        %v337 = vlaneseq
        %v338 = vshrl.u32 %v337, 7
        %v339 = vsub.s32 %v336, %v338
        %v340 = vrot.slane %v326, %v339
        %v341 = vcombine.high %v333, 0
        %v342 = vcombine.high %v340, 0
        %v343 = vcombine.low %v221, %v233
        %v345 = vunpack.c.l.s4 1983009808
        %v346 = vunpack.c.0.s8 %v345
        %v347 = vlaneseq
        %v348 = vshrl.u32 %v347, 7
        %v349 = vsub.s32 %v346, %v348
        %v350 = vrot.slane %v343, %v349
        %v351 = vcombine.low %v227, %v239
        %v353 = vunpack.c.l.s4 1983009808
        %v354 = vunpack.c.0.s8 %v353
        %v355 = vlaneseq
        %v356 = vshrl.u32 %v355, 7
        %v357 = vsub.s32 %v354, %v356
        %v358 = vrot.slane %v351, %v357
        %v359 = vcombine.low %v350, %v358
        %v360 = vcombine.high %v350, %v358
        %v362 = vunpack.c.l.s4 1934713408
        %v363 = vunpack.c.0.s8 %v362
        %v364 = vlaneseq
        %v365 = vshrl.u32 %v364, 7
        %v366 = vsub.s32 %v363, %v365
        %v367 = vrot.slane %v359, %v366
        %v369 = vunpack.c.l.s4 1934713408
        %v370 = vunpack.c.0.s8 %v369
        %v371 = vlaneseq
        %v372 = vshrl.u32 %v371, 7
        %v373 = vsub.s32 %v370, %v372
        %v374 = vrot.slane %v360, %v373
        %v375 = vcombine.high %v367, 0
        %v376 = vcombine.high %v374, 0
        %v379 = vpack.i.b16 %v299, %v265
        %v380 = vshrl.u32 %v265, 16
        %v381 = vshrl.u32 %v299, 16
        %v382 = vpack.i.b16 %v381, %v380
        %v385 = vpack.i.b16 %v307, %v273
        %v386 = vshrl.u32 %v273, 16
        %v387 = vshrl.u32 %v307, 16
        %v388 = vpack.i.b16 %v387, %v386
        %v391 = vpack.i.b16 %v306, %v272
        %v392 = vshrl.u32 %v272, 16
        %v393 = vshrl.u32 %v306, 16
        %v394 = vpack.i.b16 %v393, %v392
        %v397 = vpack.i.b16 %v308, %v274
        %v398 = vshrl.u32 %v274, 16
        %v399 = vshrl.u32 %v308, 16
        %v400 = vpack.i.b16 %v399, %v398
        %v403 = vpack.i.b16 %v367, %v333
        %v404 = vshrl.u32 %v333, 16
        %v405 = vshrl.u32 %v367, 16
        %v406 = vpack.i.b16 %v405, %v404
        %v409 = vpack.i.b16 %v375, %v341
        %v410 = vshrl.u32 %v341, 16
        %v411 = vshrl.u32 %v375, 16
        %v412 = vpack.i.b16 %v411, %v410
        %v415 = vpack.i.b16 %v374, %v340
        %v416 = vshrl.u32 %v340, 16
        %v417 = vshrl.u32 %v374, 16
        %v418 = vpack.i.b16 %v417, %v416
        %v421 = vpack.i.b16 %v376, %v342
        %v422 = vshrl.u32 %v342, 16
        %v423 = vshrl.u32 %v376, 16
        %v424 = vpack.i.b16 %v423, %v422
        %v425 = vunpack.c.l.b16 %v382
        %v426 = vpack.c.b16 %v425, %v425
        %427 = vrot.lane.b32.xlu0 %v426, 16
        %v428 = vpop.permute.xlu0 %427
        %v429 = vunpack.c.l.b16 %v385
        %v430 = vpack.c.b16 %v429, %v429
        %431 = vrot.lane.b32.xlu0 %v430, 32
        %v432 = vpop.permute.xlu0 %431
        %v433 = vunpack.c.l.b16 %v388
        %v434 = vpack.c.b16 %v433, %v433
        %435 = vrot.lane.b32.xlu0 %v434, 48
        %v436 = vpop.permute.xlu0 %435
        %v437 = vunpack.c.l.b16 %v391
        %v438 = vpack.c.b16 %v437, %v437
        %439 = vrot.lane.b32.xlu0 %v438, 64
        %v440 = vpop.permute.xlu0 %439
        %v441 = vunpack.c.l.b16 %v394
        %v442 = vpack.c.b16 %v441, %v441
        %443 = vrot.lane.b32.xlu0 %v442, 80
        %v444 = vpop.permute.xlu0 %443
        %v445 = vunpack.c.l.b16 %v397
        %v446 = vpack.c.b16 %v445, %v445
        %447 = vrot.lane.b32.xlu0 %v446, 96
        %v448 = vpop.permute.xlu0 %447
        %v449 = vunpack.c.l.b16 %v400
        %v450 = vpack.c.b16 %v449, %v449
        %451 = vrot.lane.b32.xlu0 %v450, 112
        %v452 = vpop.permute.xlu0 %451
        %v453 = vunpack.c.l.b16 %v406
        %v454 = vpack.c.b16 %v453, %v453
        %455 = vrot.lane.b32.xlu0 %v454, 16
        %v456 = vpop.permute.xlu0 %455
        %v457 = vunpack.c.l.b16 %v409
        %v458 = vpack.c.b16 %v457, %v457
        %459 = vrot.lane.b32.xlu0 %v458, 32
        %v460 = vpop.permute.xlu0 %459
        %v461 = vunpack.c.l.b16 %v412
        %v462 = vpack.c.b16 %v461, %v461
        %463 = vrot.lane.b32.xlu0 %v462, 48
        %v464 = vpop.permute.xlu0 %463
        %v465 = vunpack.c.l.b16 %v415
        %v466 = vpack.c.b16 %v465, %v465
        %467 = vrot.lane.b32.xlu0 %v466, 64
        %v468 = vpop.permute.xlu0 %467
        %v469 = vunpack.c.l.b16 %v418
        %v470 = vpack.c.b16 %v469, %v469
        %471 = vrot.lane.b32.xlu0 %v470, 80
        %v472 = vpop.permute.xlu0 %471
        %v473 = vunpack.c.l.b16 %v421
        %v474 = vpack.c.b16 %v473, %v473
        %475 = vrot.lane.b32.xlu0 %v474, 96
        %v476 = vpop.permute.xlu0 %475
        %v477 = vunpack.c.l.b16 %v424
        %v478 = vpack.c.b16 %v477, %v477
        %479 = vrot.lane.b32.xlu0 %v478, 112
        %v480 = vpop.permute.xlu0 %479
        %vm481 = vcmask 130048
        %v484 = vsel %vm481, %v379, %v428
        %vm485 = vcmask 261120
        %v487 = vsel %vm485, %v484, %v432
        %vm488 = vcmask 392192
        %v490 = vsel %vm488, %v487, %v436
        %vm491 = vcmask 523264
        %v493 = vsel %vm491, %v490, %v440
        %vm494 = vcmask 654336
        %v496 = vsel %vm494, %v493, %v444
        %vm497 = vcmask 785408
        %v499 = vsel %vm497, %v496, %v448
        %vm500 = vcmask 916480
        %v502 = vsel %vm500, %v499, %v452
        %v505 = vsel %vm481, %v403, %v456
        %v507 = vsel %vm485, %v505, %v460
        %v509 = vsel %vm488, %v507, %v464
        %v511 = vsel %vm491, %v509, %v468
        %v513 = vsel %vm494, %v511, %v472
        %v515 = vsel %vm497, %v513, %v476
        %v517 = vsel %vm500, %v515, %v480
        %534 = vrot.lane.b32.xlu0 %v217, 127
        %v535 = vpop.permute.xlu0 %534
        %536 = vrot.lane.b32.xlu0 %v218, 127
        %v537 = vpop.permute.xlu0 %536
        %538 = vrot.lane.b32.xlu0 %v220, 127
        %v539 = vpop.permute.xlu0 %538
        %540 = vrot.lane.b32.xlu0 %v221, 127
        %v541 = vpop.permute.xlu0 %540
        %542 = vrot.lane.b32.xlu0 %v223, 127
        %v543 = vpop.permute.xlu0 %542
        %544 = vrot.lane.b32.xlu0 %v224, 127
        %v545 = vpop.permute.xlu0 %544
        %546 = vrot.lane.b32.xlu0 %v226, 127
        %v547 = vpop.permute.xlu0 %546
        %548 = vrot.lane.b32.xlu0 %v227, 127
        %v549 = vpop.permute.xlu0 %548
        %550 = vrot.lane.b32.xlu0 %v229, 127
        %v551 = vpop.permute.xlu0 %550
        %552 = vrot.lane.b32.xlu0 %v230, 127
        %v553 = vpop.permute.xlu0 %552
        %554 = vrot.lane.b32.xlu0 %v232, 127
        %v555 = vpop.permute.xlu0 %554
        %556 = vrot.lane.b32.xlu0 %v233, 127
        %v557 = vpop.permute.xlu0 %556
        %558 = vrot.lane.b32.xlu0 %v235, 127
        %v559 = vpop.permute.xlu0 %558
        %560 = vrot.lane.b32.xlu0 %v236, 127
        %v561 = vpop.permute.xlu0 %560
        %562 = vrot.lane.b32.xlu0 %v238, 127
        %v563 = vpop.permute.xlu0 %562
        %564 = vrot.lane.b32.xlu0 %v239, 127
        %v565 = vpop.permute.xlu0 %564
        %v582 = vcombine.low %v535, %v551
        %v584 = vunpack.c.l.s4 1983009808
        %v585 = vunpack.c.0.s8 %v584
        %v586 = vlaneseq
        %v587 = vshrl.u32 %v586, 7
        %v588 = vsub.s32 %v585, %v587
        %v589 = vrot.slane %v582, %v588
        %v590 = vcombine.low %v543, %v559
        %v592 = vunpack.c.l.s4 1983009808
        %v593 = vunpack.c.0.s8 %v592
        %v594 = vlaneseq
        %v595 = vshrl.u32 %v594, 7
        %v596 = vsub.s32 %v593, %v595
        %v597 = vrot.slane %v590, %v596
        %v598 = vcombine.low %v589, %v597
        %v599 = vcombine.high %v589, %v597
        %v601 = vunpack.c.l.s4 1934713408
        %v602 = vunpack.c.0.s8 %v601
        %v603 = vlaneseq
        %v604 = vshrl.u32 %v603, 7
        %v605 = vsub.s32 %v602, %v604
        %v606 = vrot.slane %v598, %v605
        %v608 = vunpack.c.l.s4 1934713408
        %v609 = vunpack.c.0.s8 %v608
        %v610 = vlaneseq
        %v611 = vshrl.u32 %v610, 7
        %v612 = vsub.s32 %v609, %v611
        %v613 = vrot.slane %v599, %v612
        %v614 = vcombine.high %v606, 0
        %v615 = vcombine.high %v613, 0
        %v616 = vcombine.low %v539, %v555
        %v618 = vunpack.c.l.s4 1983009808
        %v619 = vunpack.c.0.s8 %v618
        %v620 = vlaneseq
        %v621 = vshrl.u32 %v620, 7
        %v622 = vsub.s32 %v619, %v621
        %v623 = vrot.slane %v616, %v622
        %v624 = vcombine.low %v547, %v563
        %v626 = vunpack.c.l.s4 1983009808
        %v627 = vunpack.c.0.s8 %v626
        %v628 = vlaneseq
        %v629 = vshrl.u32 %v628, 7
        %v630 = vsub.s32 %v627, %v629
        %v631 = vrot.slane %v624, %v630
        %v632 = vcombine.low %v623, %v631
        %v633 = vcombine.high %v623, %v631
        %v635 = vunpack.c.l.s4 1934713408
        %v636 = vunpack.c.0.s8 %v635
        %v637 = vlaneseq
        %v638 = vshrl.u32 %v637, 7
        %v639 = vsub.s32 %v636, %v638
        %v640 = vrot.slane %v632, %v639
        %v642 = vunpack.c.l.s4 1934713408
        %v643 = vunpack.c.0.s8 %v642
        %v644 = vlaneseq
        %v645 = vshrl.u32 %v644, 7
        %v646 = vsub.s32 %v643, %v645
        %v647 = vrot.slane %v633, %v646
        %v648 = vcombine.high %v640, 0
        %v649 = vcombine.high %v647, 0
        %v650 = vcombine.low %v537, %v553
        %v652 = vunpack.c.l.s4 1983009808
        %v653 = vunpack.c.0.s8 %v652
        %v654 = vlaneseq
        %v655 = vshrl.u32 %v654, 7
        %v656 = vsub.s32 %v653, %v655
        %v657 = vrot.slane %v650, %v656
        %v658 = vcombine.low %v545, %v561
        %v660 = vunpack.c.l.s4 1983009808
        %v661 = vunpack.c.0.s8 %v660
        %v662 = vlaneseq
        %v663 = vshrl.u32 %v662, 7
        %v664 = vsub.s32 %v661, %v663
        %v665 = vrot.slane %v658, %v664
        %v666 = vcombine.low %v657, %v665
        %v667 = vcombine.high %v657, %v665
        %v669 = vunpack.c.l.s4 1934713408
        %v670 = vunpack.c.0.s8 %v669
        %v671 = vlaneseq
        %v672 = vshrl.u32 %v671, 7
        %v673 = vsub.s32 %v670, %v672
        %v674 = vrot.slane %v666, %v673
        %v676 = vunpack.c.l.s4 1934713408
        %v677 = vunpack.c.0.s8 %v676
        %v678 = vlaneseq
        %v679 = vshrl.u32 %v678, 7
        %v680 = vsub.s32 %v677, %v679
        %v681 = vrot.slane %v667, %v680
        %v682 = vcombine.high %v674, 0
        %v683 = vcombine.high %v681, 0
        %v684 = vcombine.low %v541, %v557
        %v686 = vunpack.c.l.s4 1983009808
        %v687 = vunpack.c.0.s8 %v686
        %v688 = vlaneseq
        %v689 = vshrl.u32 %v688, 7
        %v690 = vsub.s32 %v687, %v689
        %v691 = vrot.slane %v684, %v690
        %v692 = vcombine.low %v549, %v565
        %v694 = vunpack.c.l.s4 1983009808
        %v695 = vunpack.c.0.s8 %v694
        %v696 = vlaneseq
        %v697 = vshrl.u32 %v696, 7
        %v698 = vsub.s32 %v695, %v697
        %v699 = vrot.slane %v692, %v698
        %v700 = vcombine.low %v691, %v699
        %v701 = vcombine.high %v691, %v699
        %v703 = vunpack.c.l.s4 1934713408
        %v704 = vunpack.c.0.s8 %v703
        %v705 = vlaneseq
        %v706 = vshrl.u32 %v705, 7
        %v707 = vsub.s32 %v704, %v706
        %v708 = vrot.slane %v700, %v707
        %v710 = vunpack.c.l.s4 1934713408
        %v711 = vunpack.c.0.s8 %v710
        %v712 = vlaneseq
        %v713 = vshrl.u32 %v712, 7
        %v714 = vsub.s32 %v711, %v713
        %v715 = vrot.slane %v701, %v714
        %v716 = vcombine.high %v708, 0
        %v717 = vcombine.high %v715, 0
        %v720 = vpack.i.b16 %v640, %v606
        %v721 = vshrl.u32 %v606, 16
        %v722 = vshrl.u32 %v640, 16
        %v723 = vpack.i.b16 %v722, %v721
        %v726 = vpack.i.b16 %v648, %v614
        %v727 = vshrl.u32 %v614, 16
        %v728 = vshrl.u32 %v648, 16
        %v729 = vpack.i.b16 %v728, %v727
        %v732 = vpack.i.b16 %v647, %v613
        %v733 = vshrl.u32 %v613, 16
        %v734 = vshrl.u32 %v647, 16
        %v735 = vpack.i.b16 %v734, %v733
        %v738 = vpack.i.b16 %v649, %v615
        %v739 = vshrl.u32 %v615, 16
        %v740 = vshrl.u32 %v649, 16
        %v741 = vpack.i.b16 %v740, %v739
        %v744 = vpack.i.b16 %v708, %v674
        %v745 = vshrl.u32 %v674, 16
        %v746 = vshrl.u32 %v708, 16
        %v747 = vpack.i.b16 %v746, %v745
        %v750 = vpack.i.b16 %v716, %v682
        %v751 = vshrl.u32 %v682, 16
        %v752 = vshrl.u32 %v716, 16
        %v753 = vpack.i.b16 %v752, %v751
        %v756 = vpack.i.b16 %v715, %v681
        %v757 = vshrl.u32 %v681, 16
        %v758 = vshrl.u32 %v715, 16
        %v759 = vpack.i.b16 %v758, %v757
        %v762 = vpack.i.b16 %v717, %v683
        %v763 = vshrl.u32 %v683, 16
        %v764 = vshrl.u32 %v717, 16
        %v765 = vpack.i.b16 %v764, %v763
        %v766 = vunpack.c.l.b16 %v723
        %v767 = vpack.c.b16 %v766, %v766
        %768 = vrot.lane.b32.xlu0 %v767, 16
        %v769 = vpop.permute.xlu0 %768
        %v770 = vunpack.c.l.b16 %v726
        %v771 = vpack.c.b16 %v770, %v770
        %772 = vrot.lane.b32.xlu0 %v771, 32
        %v773 = vpop.permute.xlu0 %772
        %v774 = vunpack.c.l.b16 %v729
        %v775 = vpack.c.b16 %v774, %v774
        %776 = vrot.lane.b32.xlu0 %v775, 48
        %v777 = vpop.permute.xlu0 %776
        %v778 = vunpack.c.l.b16 %v732
        %v779 = vpack.c.b16 %v778, %v778
        %780 = vrot.lane.b32.xlu0 %v779, 64
        %v781 = vpop.permute.xlu0 %780
        %v782 = vunpack.c.l.b16 %v735
        %v783 = vpack.c.b16 %v782, %v782
        %784 = vrot.lane.b32.xlu0 %v783, 80
        %v785 = vpop.permute.xlu0 %784
        %v786 = vunpack.c.l.b16 %v738
        %v787 = vpack.c.b16 %v786, %v786
        %788 = vrot.lane.b32.xlu0 %v787, 96
        %v789 = vpop.permute.xlu0 %788
        %v790 = vunpack.c.l.b16 %v741
        %v791 = vpack.c.b16 %v790, %v790
        %792 = vrot.lane.b32.xlu0 %v791, 112
        %v793 = vpop.permute.xlu0 %792
        %v794 = vunpack.c.l.b16 %v747
        %v795 = vpack.c.b16 %v794, %v794
        %796 = vrot.lane.b32.xlu0 %v795, 16
        %v797 = vpop.permute.xlu0 %796
        %v798 = vunpack.c.l.b16 %v750
        %v799 = vpack.c.b16 %v798, %v798
        %800 = vrot.lane.b32.xlu0 %v799, 32
        %v801 = vpop.permute.xlu0 %800
        %v802 = vunpack.c.l.b16 %v753
        %v803 = vpack.c.b16 %v802, %v802
        %804 = vrot.lane.b32.xlu0 %v803, 48
        %v805 = vpop.permute.xlu0 %804
        %v806 = vunpack.c.l.b16 %v756
        %v807 = vpack.c.b16 %v806, %v806
        %808 = vrot.lane.b32.xlu0 %v807, 64
        %v809 = vpop.permute.xlu0 %808
        %v810 = vunpack.c.l.b16 %v759
        %v811 = vpack.c.b16 %v810, %v810
        %812 = vrot.lane.b32.xlu0 %v811, 80
        %v813 = vpop.permute.xlu0 %812
        %v814 = vunpack.c.l.b16 %v762
        %v815 = vpack.c.b16 %v814, %v814
        %816 = vrot.lane.b32.xlu0 %v815, 96
        %v817 = vpop.permute.xlu0 %816
        %v818 = vunpack.c.l.b16 %v765
        %v819 = vpack.c.b16 %v818, %v818
        %820 = vrot.lane.b32.xlu0 %v819, 112
        %v821 = vpop.permute.xlu0 %820
        %v824 = vsel %vm481, %v720, %v769
        %v826 = vsel %vm485, %v824, %v773
        %v828 = vsel %vm488, %v826, %v777
        %v830 = vsel %vm491, %v828, %v781
        %v832 = vsel %vm494, %v830, %v785
        %v834 = vsel %vm497, %v832, %v789
        %v836 = vsel %vm500, %v834, %v793
        %v839 = vsel %vm481, %v744, %v797
        %v841 = vsel %vm485, %v839, %v801
        %v843 = vsel %vm488, %v841, %v805
        %v845 = vsel %vm491, %v843, %v809
        %v847 = vsel %vm494, %v845, %v813
        %v849 = vsel %vm497, %v847, %v817
        %v851 = vsel %vm500, %v849, %v821
        %852 = vrot.lane.b32.xlu0 %v217, 126
        %v853 = vpop.permute.xlu0 %852
        %854 = vrot.lane.b32.xlu0 %v218, 126
        %v855 = vpop.permute.xlu0 %854
        %856 = vrot.lane.b32.xlu0 %v220, 126
        %v857 = vpop.permute.xlu0 %856
        %858 = vrot.lane.b32.xlu0 %v221, 126
        %v859 = vpop.permute.xlu0 %858
        %860 = vrot.lane.b32.xlu0 %v223, 126
        %v861 = vpop.permute.xlu0 %860
        %862 = vrot.lane.b32.xlu0 %v224, 126
        %v863 = vpop.permute.xlu0 %862
        %864 = vrot.lane.b32.xlu0 %v226, 126
        %v865 = vpop.permute.xlu0 %864
        %866 = vrot.lane.b32.xlu0 %v227, 126
        %v867 = vpop.permute.xlu0 %866
        %868 = vrot.lane.b32.xlu0 %v229, 126
        %v869 = vpop.permute.xlu0 %868
        %870 = vrot.lane.b32.xlu0 %v230, 126
        %v871 = vpop.permute.xlu0 %870
        %872 = vrot.lane.b32.xlu0 %v232, 126
        %v873 = vpop.permute.xlu0 %872
        %874 = vrot.lane.b32.xlu0 %v233, 126
        %v875 = vpop.permute.xlu0 %874
        %876 = vrot.lane.b32.xlu0 %v235, 126
        %v877 = vpop.permute.xlu0 %876
        %878 = vrot.lane.b32.xlu0 %v236, 126
        %v879 = vpop.permute.xlu0 %878
        %880 = vrot.lane.b32.xlu0 %v238, 126
        %v881 = vpop.permute.xlu0 %880
        %882 = vrot.lane.b32.xlu0 %v239, 126
        %v883 = vpop.permute.xlu0 %882
        %v900 = vcombine.low %v853, %v869
        %v902 = vunpack.c.l.s4 1983009808
        %v903 = vunpack.c.0.s8 %v902
        %v904 = vlaneseq
        %v905 = vshrl.u32 %v904, 7
        %v906 = vsub.s32 %v903, %v905
        %v907 = vrot.slane %v900, %v906
        %v908 = vcombine.low %v861, %v877
        %v910 = vunpack.c.l.s4 1983009808
        %v911 = vunpack.c.0.s8 %v910
        %v912 = vlaneseq
        %v913 = vshrl.u32 %v912, 7
        %v914 = vsub.s32 %v911, %v913
        %v915 = vrot.slane %v908, %v914
        %v916 = vcombine.low %v907, %v915
        %v917 = vcombine.high %v907, %v915
        %v919 = vunpack.c.l.s4 1934713408
        %v920 = vunpack.c.0.s8 %v919
        %v921 = vlaneseq
        %v922 = vshrl.u32 %v921, 7
        %v923 = vsub.s32 %v920, %v922
        %v924 = vrot.slane %v916, %v923
        %v926 = vunpack.c.l.s4 1934713408
        %v927 = vunpack.c.0.s8 %v926
        %v928 = vlaneseq
        %v929 = vshrl.u32 %v928, 7
        %v930 = vsub.s32 %v927, %v929
        %v931 = vrot.slane %v917, %v930
        %v932 = vcombine.high %v924, 0
        %v933 = vcombine.high %v931, 0
        %v934 = vcombine.low %v857, %v873
        %v936 = vunpack.c.l.s4 1983009808
        %v937 = vunpack.c.0.s8 %v936
        %v938 = vlaneseq
        %v939 = vshrl.u32 %v938, 7
        %v940 = vsub.s32 %v937, %v939
        %v941 = vrot.slane %v934, %v940
        %v942 = vcombine.low %v865, %v881
        %v944 = vunpack.c.l.s4 1983009808
        %v945 = vunpack.c.0.s8 %v944
        %v946 = vlaneseq
        %v947 = vshrl.u32 %v946, 7
        %v948 = vsub.s32 %v945, %v947
        %v949 = vrot.slane %v942, %v948
        %v950 = vcombine.low %v941, %v949
        %v951 = vcombine.high %v941, %v949
        %v953 = vunpack.c.l.s4 1934713408
        %v954 = vunpack.c.0.s8 %v953
        %v955 = vlaneseq
        %v956 = vshrl.u32 %v955, 7
        %v957 = vsub.s32 %v954, %v956
        %v958 = vrot.slane %v950, %v957
        %v960 = vunpack.c.l.s4 1934713408
        %v961 = vunpack.c.0.s8 %v960
        %v962 = vlaneseq
        %v963 = vshrl.u32 %v962, 7
        %v964 = vsub.s32 %v961, %v963
        %v965 = vrot.slane %v951, %v964
        %v966 = vcombine.high %v958, 0
        %v967 = vcombine.high %v965, 0
        %v968 = vcombine.low %v855, %v871
        %v970 = vunpack.c.l.s4 1983009808
        %v971 = vunpack.c.0.s8 %v970
        %v972 = vlaneseq
        %v973 = vshrl.u32 %v972, 7
        %v974 = vsub.s32 %v971, %v973
        %v975 = vrot.slane %v968, %v974
        %v976 = vcombine.low %v863, %v879
        %v978 = vunpack.c.l.s4 1983009808
        %v979 = vunpack.c.0.s8 %v978
        %v980 = vlaneseq
        %v981 = vshrl.u32 %v980, 7
        %v982 = vsub.s32 %v979, %v981
        %v983 = vrot.slane %v976, %v982
        %v984 = vcombine.low %v975, %v983
        %v985 = vcombine.high %v975, %v983
        %v987 = vunpack.c.l.s4 1934713408
        %v988 = vunpack.c.0.s8 %v987
        %v989 = vlaneseq
        %v990 = vshrl.u32 %v989, 7
        %v991 = vsub.s32 %v988, %v990
        %v992 = vrot.slane %v984, %v991
        %v994 = vunpack.c.l.s4 1934713408
        %v995 = vunpack.c.0.s8 %v994
        %v996 = vlaneseq
        %v997 = vshrl.u32 %v996, 7
        %v998 = vsub.s32 %v995, %v997
        %v999 = vrot.slane %v985, %v998
        %v1000 = vcombine.high %v992, 0
        %v1001 = vcombine.high %v999, 0
        %v1002 = vcombine.low %v859, %v875
        %v1004 = vunpack.c.l.s4 1983009808
        %v1005 = vunpack.c.0.s8 %v1004
        %v1006 = vlaneseq
        %v1007 = vshrl.u32 %v1006, 7
        %v1008 = vsub.s32 %v1005, %v1007
        %v1009 = vrot.slane %v1002, %v1008
        %v1010 = vcombine.low %v867, %v883
        %v1012 = vunpack.c.l.s4 1983009808
        %v1013 = vunpack.c.0.s8 %v1012
        %v1014 = vlaneseq
        %v1015 = vshrl.u32 %v1014, 7
        %v1016 = vsub.s32 %v1013, %v1015
        %v1017 = vrot.slane %v1010, %v1016
        %v1018 = vcombine.low %v1009, %v1017
        %v1019 = vcombine.high %v1009, %v1017
        %v1021 = vunpack.c.l.s4 1934713408
        %v1022 = vunpack.c.0.s8 %v1021
        %v1023 = vlaneseq
        %v1024 = vshrl.u32 %v1023, 7
        %v1025 = vsub.s32 %v1022, %v1024
        %v1026 = vrot.slane %v1018, %v1025
        %v1028 = vunpack.c.l.s4 1934713408
        %v1029 = vunpack.c.0.s8 %v1028
        %v1030 = vlaneseq
        %v1031 = vshrl.u32 %v1030, 7
        %v1032 = vsub.s32 %v1029, %v1031
        %v1033 = vrot.slane %v1019, %v1032
        %v1034 = vcombine.high %v1026, 0
        %v1035 = vcombine.high %v1033, 0
        %v1038 = vpack.i.b16 %v958, %v924
        %v1039 = vshrl.u32 %v924, 16
        %v1040 = vshrl.u32 %v958, 16
        %v1041 = vpack.i.b16 %v1040, %v1039
        %v1044 = vpack.i.b16 %v966, %v932
        %v1045 = vshrl.u32 %v932, 16
        %v1046 = vshrl.u32 %v966, 16
        %v1047 = vpack.i.b16 %v1046, %v1045
        %v1050 = vpack.i.b16 %v965, %v931
        %v1051 = vshrl.u32 %v931, 16
        %v1052 = vshrl.u32 %v965, 16
        %v1053 = vpack.i.b16 %v1052, %v1051
        %v1056 = vpack.i.b16 %v967, %v933
        %v1057 = vshrl.u32 %v933, 16
        %v1058 = vshrl.u32 %v967, 16
        %v1059 = vpack.i.b16 %v1058, %v1057
        %v1062 = vpack.i.b16 %v1026, %v992
        %v1063 = vshrl.u32 %v992, 16
        %v1064 = vshrl.u32 %v1026, 16
        %v1065 = vpack.i.b16 %v1064, %v1063
        %v1068 = vpack.i.b16 %v1034, %v1000
        %v1069 = vshrl.u32 %v1000, 16
        %v1070 = vshrl.u32 %v1034, 16
        %v1071 = vpack.i.b16 %v1070, %v1069
        %v1074 = vpack.i.b16 %v1033, %v999
        %v1075 = vshrl.u32 %v999, 16
        %v1076 = vshrl.u32 %v1033, 16
        %v1077 = vpack.i.b16 %v1076, %v1075
        %v1080 = vpack.i.b16 %v1035, %v1001
        %v1081 = vshrl.u32 %v1001, 16
        %v1082 = vshrl.u32 %v1035, 16
        %v1083 = vpack.i.b16 %v1082, %v1081
        %v1084 = vunpack.c.l.b16 %v1041
        %v1085 = vpack.c.b16 %v1084, %v1084
        %1086 = vrot.lane.b32.xlu0 %v1085, 16
        %v1087 = vpop.permute.xlu0 %1086
        %v1088 = vunpack.c.l.b16 %v1044
        %v1089 = vpack.c.b16 %v1088, %v1088
        %1090 = vrot.lane.b32.xlu0 %v1089, 32
        %v1091 = vpop.permute.xlu0 %1090
        %v1092 = vunpack.c.l.b16 %v1047
        %v1093 = vpack.c.b16 %v1092, %v1092
        %1094 = vrot.lane.b32.xlu0 %v1093, 48
        %v1095 = vpop.permute.xlu0 %1094
        %v1096 = vunpack.c.l.b16 %v1050
        %v1097 = vpack.c.b16 %v1096, %v1096
        %1098 = vrot.lane.b32.xlu0 %v1097, 64
        %v1099 = vpop.permute.xlu0 %1098
        %v1100 = vunpack.c.l.b16 %v1053
        %v1101 = vpack.c.b16 %v1100, %v1100
        %1102 = vrot.lane.b32.xlu0 %v1101, 80
        %v1103 = vpop.permute.xlu0 %1102
        %v1104 = vunpack.c.l.b16 %v1056
        %v1105 = vpack.c.b16 %v1104, %v1104
        %1106 = vrot.lane.b32.xlu0 %v1105, 96
        %v1107 = vpop.permute.xlu0 %1106
        %v1108 = vunpack.c.l.b16 %v1059
        %v1109 = vpack.c.b16 %v1108, %v1108
        %1110 = vrot.lane.b32.xlu0 %v1109, 112
        %v1111 = vpop.permute.xlu0 %1110
        %v1112 = vunpack.c.l.b16 %v1065
        %v1113 = vpack.c.b16 %v1112, %v1112
        %1114 = vrot.lane.b32.xlu0 %v1113, 16
        %v1115 = vpop.permute.xlu0 %1114
        %v1116 = vunpack.c.l.b16 %v1068
        %v1117 = vpack.c.b16 %v1116, %v1116
        %1118 = vrot.lane.b32.xlu0 %v1117, 32
        %v1119 = vpop.permute.xlu0 %1118
        %v1120 = vunpack.c.l.b16 %v1071
        %v1121 = vpack.c.b16 %v1120, %v1120
        %1122 = vrot.lane.b32.xlu0 %v1121, 48
        %v1123 = vpop.permute.xlu0 %1122
        %v1124 = vunpack.c.l.b16 %v1074
        %v1125 = vpack.c.b16 %v1124, %v1124
        %1126 = vrot.lane.b32.xlu0 %v1125, 64
        %v1127 = vpop.permute.xlu0 %1126
        %v1128 = vunpack.c.l.b16 %v1077
        %v1129 = vpack.c.b16 %v1128, %v1128
        %1130 = vrot.lane.b32.xlu0 %v1129, 80
        %v1131 = vpop.permute.xlu0 %1130
        %v1132 = vunpack.c.l.b16 %v1080
        %v1133 = vpack.c.b16 %v1132, %v1132
        %1134 = vrot.lane.b32.xlu0 %v1133, 96
        %v1135 = vpop.permute.xlu0 %1134
        %v1136 = vunpack.c.l.b16 %v1083
        %v1137 = vpack.c.b16 %v1136, %v1136
        %1138 = vrot.lane.b32.xlu0 %v1137, 112
        %v1139 = vpop.permute.xlu0 %1138
        %v1142 = vsel %vm481, %v1038, %v1087
        %v1144 = vsel %vm485, %v1142, %v1091
        %v1146 = vsel %vm488, %v1144, %v1095
        %v1148 = vsel %vm491, %v1146, %v1099
        %v1150 = vsel %vm494, %v1148, %v1103
        %v1152 = vsel %vm497, %v1150, %v1107
        %v1154 = vsel %vm500, %v1152, %v1111
        %v1157 = vsel %vm481, %v1062, %v1115
        %v1159 = vsel %vm485, %v1157, %v1119
        %v1161 = vsel %vm488, %v1159, %v1123
        %v1163 = vsel %vm491, %v1161, %v1127
        %v1165 = vsel %vm494, %v1163, %v1131
        %v1167 = vsel %vm497, %v1165, %v1135
        %v1169 = vsel %vm500, %v1167, %v1139
        %vm1170 = vsmask.f32 3328
        %vm1171 = vsmask.f32 7440
        %vm1172 = vmor %vm1170, %vm1171
        %v1174 = vshrl.u32 %v217, 16
        %v1176 = vrot.slane %v1174, 4
        %v1177 = vshll.u32 %v217, 16
        %v1179 = vrot.slane %v1177, 5
        %v1180 = vor.u32 %v1176, %v1179
        %v1181 = vrot.slane %v1180, 4
        %v1183 = vshll.u32 %v218, 16
        %v1185 = vrot.slane %v1183, 5
        %v1186 = vsel %vm1172, %v1181, %v1185
        %v1187 = vshrl.u32 %v218, 16
        %v1189 = vrot.slane %v1187, 4
        %v1190 = vor.u32 %v1189, %v1185
        %v1191 = vrot.slane %v1190, 4
        %v1193 = vshll.u32 %v219, 16
        %v1195 = vrot.slane %v1193, 5
        %v1196 = vsel %vm1172, %v1191, %v1195
        %v1198 = vshrl.u32 %v220, 16
        %v1200 = vrot.slane %v1198, 4
        %v1201 = vshll.u32 %v220, 16
        %v1203 = vrot.slane %v1201, 5
        %v1204 = vor.u32 %v1200, %v1203
        %v1205 = vrot.slane %v1204, 4
        %v1207 = vshll.u32 %v221, 16
        %v1209 = vrot.slane %v1207, 5
        %v1210 = vsel %vm1172, %v1205, %v1209
        %v1211 = vshrl.u32 %v221, 16
        %v1213 = vrot.slane %v1211, 4
        %v1214 = vor.u32 %v1213, %v1209
        %v1215 = vrot.slane %v1214, 4
        %v1217 = vshll.u32 %v222, 16
        %v1219 = vrot.slane %v1217, 5
        %v1220 = vsel %vm1172, %v1215, %v1219
        %v1222 = vshrl.u32 %v223, 16
        %v1224 = vrot.slane %v1222, 4
        %v1225 = vshll.u32 %v223, 16
        %v1227 = vrot.slane %v1225, 5
        %v1228 = vor.u32 %v1224, %v1227
        %v1229 = vrot.slane %v1228, 4
        %v1231 = vshll.u32 %v224, 16
        %v1233 = vrot.slane %v1231, 5
        %v1234 = vsel %vm1172, %v1229, %v1233
        %v1235 = vshrl.u32 %v224, 16
        %v1237 = vrot.slane %v1235, 4
        %v1238 = vor.u32 %v1237, %v1233
        %v1239 = vrot.slane %v1238, 4
        %v1241 = vshll.u32 %v225, 16
        %v1243 = vrot.slane %v1241, 5
        %v1244 = vsel %vm1172, %v1239, %v1243
        %v1246 = vshrl.u32 %v226, 16
        %v1248 = vrot.slane %v1246, 4
        %v1249 = vshll.u32 %v226, 16
        %v1251 = vrot.slane %v1249, 5
        %v1252 = vor.u32 %v1248, %v1251
        %v1253 = vrot.slane %v1252, 4
        %v1255 = vshll.u32 %v227, 16
        %v1257 = vrot.slane %v1255, 5
        %v1258 = vsel %vm1172, %v1253, %v1257
        %v1259 = vshrl.u32 %v227, 16
        %v1261 = vrot.slane %v1259, 4
        %v1262 = vor.u32 %v1261, %v1257
        %v1263 = vrot.slane %v1262, 4
        %v1265 = vshll.u32 %v228, 16
        %v1267 = vrot.slane %v1265, 5
        %v1268 = vsel %vm1172, %v1263, %v1267
        %v1270 = vshrl.u32 %v229, 16
        %v1272 = vrot.slane %v1270, 4
        %v1273 = vshll.u32 %v229, 16
        %v1275 = vrot.slane %v1273, 5
        %v1276 = vor.u32 %v1272, %v1275
        %v1277 = vrot.slane %v1276, 4
        %v1279 = vshll.u32 %v230, 16
        %v1281 = vrot.slane %v1279, 5
        %v1282 = vsel %vm1172, %v1277, %v1281
        %v1283 = vshrl.u32 %v230, 16
        %v1285 = vrot.slane %v1283, 4
        %v1286 = vor.u32 %v1285, %v1281
        %v1287 = vrot.slane %v1286, 4
        %v1289 = vshll.u32 %v231, 16
        %v1291 = vrot.slane %v1289, 5
        %v1292 = vsel %vm1172, %v1287, %v1291
        %v1294 = vshrl.u32 %v232, 16
        %v1296 = vrot.slane %v1294, 4
        %v1297 = vshll.u32 %v232, 16
        %v1299 = vrot.slane %v1297, 5
        %v1300 = vor.u32 %v1296, %v1299
        %v1301 = vrot.slane %v1300, 4
        %v1303 = vshll.u32 %v233, 16
        %v1305 = vrot.slane %v1303, 5
        %v1306 = vsel %vm1172, %v1301, %v1305
        %v1307 = vshrl.u32 %v233, 16
        %v1309 = vrot.slane %v1307, 4
        %v1310 = vor.u32 %v1309, %v1305
        %v1311 = vrot.slane %v1310, 4
        %v1313 = vshll.u32 %v234, 16
        %v1315 = vrot.slane %v1313, 5
        %v1316 = vsel %vm1172, %v1311, %v1315
        %v1318 = vshrl.u32 %v235, 16
        %v1320 = vrot.slane %v1318, 4
        %v1321 = vshll.u32 %v235, 16
        %v1323 = vrot.slane %v1321, 5
        %v1324 = vor.u32 %v1320, %v1323
        %v1325 = vrot.slane %v1324, 4
        %v1327 = vshll.u32 %v236, 16
        %v1329 = vrot.slane %v1327, 5
        %v1330 = vsel %vm1172, %v1325, %v1329
        %v1331 = vshrl.u32 %v236, 16
        %v1333 = vrot.slane %v1331, 4
        %v1334 = vor.u32 %v1333, %v1329
        %v1335 = vrot.slane %v1334, 4
        %v1337 = vshll.u32 %v237, 16
        %v1339 = vrot.slane %v1337, 5
        %v1340 = vsel %vm1172, %v1335, %v1339
        %v1342 = vshrl.u32 %v238, 16
        %v1344 = vrot.slane %v1342, 4
        %v1345 = vshll.u32 %v238, 16
        %v1347 = vrot.slane %v1345, 5
        %v1348 = vor.u32 %v1344, %v1347
        %v1349 = vrot.slane %v1348, 4
        %v1351 = vshll.u32 %v239, 16
        %v1353 = vrot.slane %v1351, 5
        %v1354 = vsel %vm1172, %v1349, %v1353
        %v1355 = vshrl.u32 %v239, 16
        %v1357 = vrot.slane %v1355, 4
        %v1358 = vor.u32 %v1357, %v1353
        %v1359 = vrot.slane %v1358, 4
        %v1361 = vshll.u32 %v240, 16
        %v1363 = vrot.slane %v1361, 5
        %v1364 = vsel %vm1172, %v1359, %v1363
        %v1381 = vcombine.low %v1186, %v1282
        %v1383 = vunpack.c.l.s4 1983009808
        %v1384 = vunpack.c.0.s8 %v1383
        %v1385 = vlaneseq
        %v1386 = vshrl.u32 %v1385, 7
        %v1387 = vsub.s32 %v1384, %v1386
        %v1388 = vrot.slane %v1381, %v1387
        %v1389 = vcombine.low %v1234, %v1330
        %v1391 = vunpack.c.l.s4 1983009808
        %v1392 = vunpack.c.0.s8 %v1391
        %v1393 = vlaneseq
        %v1394 = vshrl.u32 %v1393, 7
        %v1395 = vsub.s32 %v1392, %v1394
        %v1396 = vrot.slane %v1389, %v1395
        %v1397 = vcombine.low %v1388, %v1396
        %v1398 = vcombine.high %v1388, %v1396
        %v1400 = vunpack.c.l.s4 1934713408
        %v1401 = vunpack.c.0.s8 %v1400
        %v1402 = vlaneseq
        %v1403 = vshrl.u32 %v1402, 7
        %v1404 = vsub.s32 %v1401, %v1403
        %v1405 = vrot.slane %v1397, %v1404
        %v1407 = vunpack.c.l.s4 1934713408
        %v1408 = vunpack.c.0.s8 %v1407
        %v1409 = vlaneseq
        %v1410 = vshrl.u32 %v1409, 7
        %v1411 = vsub.s32 %v1408, %v1410
        %v1412 = vrot.slane %v1398, %v1411
        %v1413 = vcombine.high %v1405, 0
        %v1414 = vcombine.high %v1412, 0
        %v1415 = vcombine.low %v1210, %v1306
        %v1417 = vunpack.c.l.s4 1983009808
        %v1418 = vunpack.c.0.s8 %v1417
        %v1419 = vlaneseq
        %v1420 = vshrl.u32 %v1419, 7
        %v1421 = vsub.s32 %v1418, %v1420
        %v1422 = vrot.slane %v1415, %v1421
        %v1423 = vcombine.low %v1258, %v1354
        %v1425 = vunpack.c.l.s4 1983009808
        %v1426 = vunpack.c.0.s8 %v1425
        %v1427 = vlaneseq
        %v1428 = vshrl.u32 %v1427, 7
        %v1429 = vsub.s32 %v1426, %v1428
        %v1430 = vrot.slane %v1423, %v1429
        %v1431 = vcombine.low %v1422, %v1430
        %v1432 = vcombine.high %v1422, %v1430
        %v1434 = vunpack.c.l.s4 1934713408
        %v1435 = vunpack.c.0.s8 %v1434
        %v1436 = vlaneseq
        %v1437 = vshrl.u32 %v1436, 7
        %v1438 = vsub.s32 %v1435, %v1437
        %v1439 = vrot.slane %v1431, %v1438
        %v1441 = vunpack.c.l.s4 1934713408
        %v1442 = vunpack.c.0.s8 %v1441
        %v1443 = vlaneseq
        %v1444 = vshrl.u32 %v1443, 7
        %v1445 = vsub.s32 %v1442, %v1444
        %v1446 = vrot.slane %v1432, %v1445
        %v1447 = vcombine.high %v1439, 0
        %v1448 = vcombine.high %v1446, 0
        %v1449 = vcombine.low %v1196, %v1292
        %v1451 = vunpack.c.l.s4 1983009808
        %v1452 = vunpack.c.0.s8 %v1451
        %v1453 = vlaneseq
        %v1454 = vshrl.u32 %v1453, 7
        %v1455 = vsub.s32 %v1452, %v1454
        %v1456 = vrot.slane %v1449, %v1455
        %v1457 = vcombine.low %v1244, %v1340
        %v1459 = vunpack.c.l.s4 1983009808
        %v1460 = vunpack.c.0.s8 %v1459
        %v1461 = vlaneseq
        %v1462 = vshrl.u32 %v1461, 7
        %v1463 = vsub.s32 %v1460, %v1462
        %v1464 = vrot.slane %v1457, %v1463
        %v1465 = vcombine.low %v1456, %v1464
        %v1466 = vcombine.high %v1456, %v1464
        %v1468 = vunpack.c.l.s4 1934713408
        %v1469 = vunpack.c.0.s8 %v1468
        %v1470 = vlaneseq
        %v1471 = vshrl.u32 %v1470, 7
        %v1472 = vsub.s32 %v1469, %v1471
        %v1473 = vrot.slane %v1465, %v1472
        %v1475 = vunpack.c.l.s4 1934713408
        %v1476 = vunpack.c.0.s8 %v1475
        %v1477 = vlaneseq
        %v1478 = vshrl.u32 %v1477, 7
        %v1479 = vsub.s32 %v1476, %v1478
        %v1480 = vrot.slane %v1466, %v1479
        %v1481 = vcombine.high %v1473, 0
        %v1482 = vcombine.high %v1480, 0
        %v1483 = vcombine.low %v1220, %v1316
        %v1485 = vunpack.c.l.s4 1983009808
        %v1486 = vunpack.c.0.s8 %v1485
        %v1487 = vlaneseq
        %v1488 = vshrl.u32 %v1487, 7
        %v1489 = vsub.s32 %v1486, %v1488
        %v1490 = vrot.slane %v1483, %v1489
        %v1491 = vcombine.low %v1268, %v1364
        %v1493 = vunpack.c.l.s4 1983009808
        %v1494 = vunpack.c.0.s8 %v1493
        %v1495 = vlaneseq
        %v1496 = vshrl.u32 %v1495, 7
        %v1497 = vsub.s32 %v1494, %v1496
        %v1498 = vrot.slane %v1491, %v1497
        %v1499 = vcombine.low %v1490, %v1498
        %v1500 = vcombine.high %v1490, %v1498
        %v1502 = vunpack.c.l.s4 1934713408
        %v1503 = vunpack.c.0.s8 %v1502
        %v1504 = vlaneseq
        %v1505 = vshrl.u32 %v1504, 7
        %v1506 = vsub.s32 %v1503, %v1505
        %v1507 = vrot.slane %v1499, %v1506
        %v1509 = vunpack.c.l.s4 1934713408
        %v1510 = vunpack.c.0.s8 %v1509
        %v1511 = vlaneseq
        %v1512 = vshrl.u32 %v1511, 7
        %v1513 = vsub.s32 %v1510, %v1512
        %v1514 = vrot.slane %v1500, %v1513
        %v1515 = vcombine.high %v1507, 0
        %v1516 = vcombine.high %v1514, 0
        %v1519 = vpack.i.b16 %v1439, %v1405
        %v1520 = vshrl.u32 %v1405, 16
        %v1521 = vshrl.u32 %v1439, 16
        %v1522 = vpack.i.b16 %v1521, %v1520
        %v1525 = vpack.i.b16 %v1447, %v1413
        %v1526 = vshrl.u32 %v1413, 16
        %v1527 = vshrl.u32 %v1447, 16
        %v1528 = vpack.i.b16 %v1527, %v1526
        %v1531 = vpack.i.b16 %v1446, %v1412
        %v1532 = vshrl.u32 %v1412, 16
        %v1533 = vshrl.u32 %v1446, 16
        %v1534 = vpack.i.b16 %v1533, %v1532
        %v1537 = vpack.i.b16 %v1448, %v1414
        %v1538 = vshrl.u32 %v1414, 16
        %v1539 = vshrl.u32 %v1448, 16
        %v1540 = vpack.i.b16 %v1539, %v1538
        %v1543 = vpack.i.b16 %v1507, %v1473
        %v1544 = vshrl.u32 %v1473, 16
        %v1545 = vshrl.u32 %v1507, 16
        %v1546 = vpack.i.b16 %v1545, %v1544
        %v1549 = vpack.i.b16 %v1515, %v1481
        %v1550 = vshrl.u32 %v1481, 16
        %v1551 = vshrl.u32 %v1515, 16
        %v1552 = vpack.i.b16 %v1551, %v1550
        %v1555 = vpack.i.b16 %v1514, %v1480
        %v1556 = vshrl.u32 %v1480, 16
        %v1557 = vshrl.u32 %v1514, 16
        %v1558 = vpack.i.b16 %v1557, %v1556
        %v1561 = vpack.i.b16 %v1516, %v1482
        %v1562 = vshrl.u32 %v1482, 16
        %v1563 = vshrl.u32 %v1516, 16
        %v1564 = vpack.i.b16 %v1563, %v1562
        %v1565 = vunpack.c.l.b16 %v1522
        %v1566 = vpack.c.b16 %v1565, %v1565
        %1567 = vrot.lane.b32.xlu0 %v1566, 16
        %v1568 = vpop.permute.xlu0 %1567
        %v1569 = vunpack.c.l.b16 %v1525
        %v1570 = vpack.c.b16 %v1569, %v1569
        %1571 = vrot.lane.b32.xlu0 %v1570, 32
        %v1572 = vpop.permute.xlu0 %1571
        %v1573 = vunpack.c.l.b16 %v1528
        %v1574 = vpack.c.b16 %v1573, %v1573
        %1575 = vrot.lane.b32.xlu0 %v1574, 48
        %v1576 = vpop.permute.xlu0 %1575
        %v1577 = vunpack.c.l.b16 %v1531
        %v1578 = vpack.c.b16 %v1577, %v1577
        %1579 = vrot.lane.b32.xlu0 %v1578, 64
        %v1580 = vpop.permute.xlu0 %1579
        %v1581 = vunpack.c.l.b16 %v1534
        %v1582 = vpack.c.b16 %v1581, %v1581
        %1583 = vrot.lane.b32.xlu0 %v1582, 80
        %v1584 = vpop.permute.xlu0 %1583
        %v1585 = vunpack.c.l.b16 %v1537
        %v1586 = vpack.c.b16 %v1585, %v1585
        %1587 = vrot.lane.b32.xlu0 %v1586, 96
        %v1588 = vpop.permute.xlu0 %1587
        %v1589 = vunpack.c.l.b16 %v1540
        %v1590 = vpack.c.b16 %v1589, %v1589
        %1591 = vrot.lane.b32.xlu0 %v1590, 112
        %v1592 = vpop.permute.xlu0 %1591
        %v1593 = vunpack.c.l.b16 %v1546
        %v1594 = vpack.c.b16 %v1593, %v1593
        %1595 = vrot.lane.b32.xlu0 %v1594, 16
        %v1596 = vpop.permute.xlu0 %1595
        %v1597 = vunpack.c.l.b16 %v1549
        %v1598 = vpack.c.b16 %v1597, %v1597
        %1599 = vrot.lane.b32.xlu0 %v1598, 32
        %v1600 = vpop.permute.xlu0 %1599
        %v1601 = vunpack.c.l.b16 %v1552
        %v1602 = vpack.c.b16 %v1601, %v1601
        %1603 = vrot.lane.b32.xlu0 %v1602, 48
        %v1604 = vpop.permute.xlu0 %1603
        %v1605 = vunpack.c.l.b16 %v1555
        %v1606 = vpack.c.b16 %v1605, %v1605
        %1607 = vrot.lane.b32.xlu0 %v1606, 64
        %v1608 = vpop.permute.xlu0 %1607
        %v1609 = vunpack.c.l.b16 %v1558
        %v1610 = vpack.c.b16 %v1609, %v1609
        %1611 = vrot.lane.b32.xlu0 %v1610, 80
        %v1612 = vpop.permute.xlu0 %1611
        %v1613 = vunpack.c.l.b16 %v1561
        %v1614 = vpack.c.b16 %v1613, %v1613
        %1615 = vrot.lane.b32.xlu0 %v1614, 96
        %v1616 = vpop.permute.xlu0 %1615
        %v1617 = vunpack.c.l.b16 %v1564
        %v1618 = vpack.c.b16 %v1617, %v1617
        %1619 = vrot.lane.b32.xlu0 %v1618, 112
        %v1620 = vpop.permute.xlu0 %1619
        %v1623 = vsel %vm481, %v1519, %v1568
        %v1625 = vsel %vm485, %v1623, %v1572
        %v1627 = vsel %vm488, %v1625, %v1576
        %v1629 = vsel %vm491, %v1627, %v1580
        %v1631 = vsel %vm494, %v1629, %v1584
        %v1633 = vsel %vm497, %v1631, %v1588
        %v1635 = vsel %vm500, %v1633, %v1592
        %v1638 = vsel %vm481, %v1543, %v1596
        %v1640 = vsel %vm485, %v1638, %v1600
        %v1642 = vsel %vm488, %v1640, %v1604
        %v1644 = vsel %vm491, %v1642, %v1608
        %v1646 = vsel %vm494, %v1644, %v1612
        %v1648 = vsel %vm497, %v1646, %v1616
        %v1650 = vsel %vm500, %v1648, %v1620
        %1651 = vrot.lane.b32.xlu0 %v1186, 127
        %v1652 = vpop.permute.xlu0 %1651
        %1653 = vrot.lane.b32.xlu0 %v1196, 127
        %v1654 = vpop.permute.xlu0 %1653
        %1655 = vrot.lane.b32.xlu0 %v1210, 127
        %v1656 = vpop.permute.xlu0 %1655
        %1657 = vrot.lane.b32.xlu0 %v1220, 127
        %v1658 = vpop.permute.xlu0 %1657
        %1659 = vrot.lane.b32.xlu0 %v1234, 127
        %v1660 = vpop.permute.xlu0 %1659
        %1661 = vrot.lane.b32.xlu0 %v1244, 127
        %v1662 = vpop.permute.xlu0 %1661
        %1663 = vrot.lane.b32.xlu0 %v1258, 127
        %v1664 = vpop.permute.xlu0 %1663
        %1665 = vrot.lane.b32.xlu0 %v1268, 127
        %v1666 = vpop.permute.xlu0 %1665
        %1667 = vrot.lane.b32.xlu0 %v1282, 127
        %v1668 = vpop.permute.xlu0 %1667
        %1669 = vrot.lane.b32.xlu0 %v1292, 127
        %v1670 = vpop.permute.xlu0 %1669
        %1671 = vrot.lane.b32.xlu0 %v1306, 127
        %v1672 = vpop.permute.xlu0 %1671
        %1673 = vrot.lane.b32.xlu0 %v1316, 127
        %v1674 = vpop.permute.xlu0 %1673
        %1675 = vrot.lane.b32.xlu0 %v1330, 127
        %v1676 = vpop.permute.xlu0 %1675
        %1677 = vrot.lane.b32.xlu0 %v1340, 127
        %v1678 = vpop.permute.xlu0 %1677
        %1679 = vrot.lane.b32.xlu0 %v1354, 127
        %v1680 = vpop.permute.xlu0 %1679
        %1681 = vrot.lane.b32.xlu0 %v1364, 127
        %v1682 = vpop.permute.xlu0 %1681
        %v1699 = vcombine.low %v1652, %v1668
        %v1701 = vunpack.c.l.s4 1983009808
        %v1702 = vunpack.c.0.s8 %v1701
        %v1703 = vlaneseq
        %v1704 = vshrl.u32 %v1703, 7
        %v1705 = vsub.s32 %v1702, %v1704
        %v1706 = vrot.slane %v1699, %v1705
        %v1707 = vcombine.low %v1660, %v1676
        %v1709 = vunpack.c.l.s4 1983009808
        %v1710 = vunpack.c.0.s8 %v1709
        %v1711 = vlaneseq
        %v1712 = vshrl.u32 %v1711, 7
        %v1713 = vsub.s32 %v1710, %v1712
        %v1714 = vrot.slane %v1707, %v1713
        %v1715 = vcombine.low %v1706, %v1714
        %v1716 = vcombine.high %v1706, %v1714
        %v1718 = vunpack.c.l.s4 1934713408
        %v1719 = vunpack.c.0.s8 %v1718
        %v1720 = vlaneseq
        %v1721 = vshrl.u32 %v1720, 7
        %v1722 = vsub.s32 %v1719, %v1721
        %v1723 = vrot.slane %v1715, %v1722
        %v1725 = vunpack.c.l.s4 1934713408
        %v1726 = vunpack.c.0.s8 %v1725
        %v1727 = vlaneseq
        %v1728 = vshrl.u32 %v1727, 7
        %v1729 = vsub.s32 %v1726, %v1728
        %v1730 = vrot.slane %v1716, %v1729
        %v1731 = vcombine.high %v1723, 0
        %v1732 = vcombine.high %v1730, 0
        %v1733 = vcombine.low %v1656, %v1672
        %v1735 = vunpack.c.l.s4 1983009808
        %v1736 = vunpack.c.0.s8 %v1735
        %v1737 = vlaneseq
        %v1738 = vshrl.u32 %v1737, 7
        %v1739 = vsub.s32 %v1736, %v1738
        %v1740 = vrot.slane %v1733, %v1739
        %v1741 = vcombine.low %v1664, %v1680
        %v1743 = vunpack.c.l.s4 1983009808
        %v1744 = vunpack.c.0.s8 %v1743
        %v1745 = vlaneseq
        %v1746 = vshrl.u32 %v1745, 7
        %v1747 = vsub.s32 %v1744, %v1746
        %v1748 = vrot.slane %v1741, %v1747
        %v1749 = vcombine.low %v1740, %v1748
        %v1750 = vcombine.high %v1740, %v1748
        %v1752 = vunpack.c.l.s4 1934713408
        %v1753 = vunpack.c.0.s8 %v1752
        %v1754 = vlaneseq
        %v1755 = vshrl.u32 %v1754, 7
        %v1756 = vsub.s32 %v1753, %v1755
        %v1757 = vrot.slane %v1749, %v1756
        %v1759 = vunpack.c.l.s4 1934713408
        %v1760 = vunpack.c.0.s8 %v1759
        %v1761 = vlaneseq
        %v1762 = vshrl.u32 %v1761, 7
        %v1763 = vsub.s32 %v1760, %v1762
        %v1764 = vrot.slane %v1750, %v1763
        %v1765 = vcombine.high %v1757, 0
        %v1766 = vcombine.high %v1764, 0
        %v1767 = vcombine.low %v1654, %v1670
        %v1769 = vunpack.c.l.s4 1983009808
        %v1770 = vunpack.c.0.s8 %v1769
        %v1771 = vlaneseq
        %v1772 = vshrl.u32 %v1771, 7
        %v1773 = vsub.s32 %v1770, %v1772
        %v1774 = vrot.slane %v1767, %v1773
        %v1775 = vcombine.low %v1662, %v1678
        %v1777 = vunpack.c.l.s4 1983009808
        %v1778 = vunpack.c.0.s8 %v1777
        %v1779 = vlaneseq
        %v1780 = vshrl.u32 %v1779, 7
        %v1781 = vsub.s32 %v1778, %v1780
        %v1782 = vrot.slane %v1775, %v1781
        %v1783 = vcombine.low %v1774, %v1782
        %v1784 = vcombine.high %v1774, %v1782
        %v1786 = vunpack.c.l.s4 1934713408
        %v1787 = vunpack.c.0.s8 %v1786
        %v1788 = vlaneseq
        %v1789 = vshrl.u32 %v1788, 7
        %v1790 = vsub.s32 %v1787, %v1789
        %v1791 = vrot.slane %v1783, %v1790
        %v1793 = vunpack.c.l.s4 1934713408
        %v1794 = vunpack.c.0.s8 %v1793
        %v1795 = vlaneseq
        %v1796 = vshrl.u32 %v1795, 7
        %v1797 = vsub.s32 %v1794, %v1796
        %v1798 = vrot.slane %v1784, %v1797
        %v1799 = vcombine.high %v1791, 0
        %v1800 = vcombine.high %v1798, 0
        %v1801 = vcombine.low %v1658, %v1674
        %v1803 = vunpack.c.l.s4 1983009808
        %v1804 = vunpack.c.0.s8 %v1803
        %v1805 = vlaneseq
        %v1806 = vshrl.u32 %v1805, 7
        %v1807 = vsub.s32 %v1804, %v1806
        %v1808 = vrot.slane %v1801, %v1807
        %v1809 = vcombine.low %v1666, %v1682
        %v1811 = vunpack.c.l.s4 1983009808
        %v1812 = vunpack.c.0.s8 %v1811
        %v1813 = vlaneseq
        %v1814 = vshrl.u32 %v1813, 7
        %v1815 = vsub.s32 %v1812, %v1814
        %v1816 = vrot.slane %v1809, %v1815
        %v1817 = vcombine.low %v1808, %v1816
        %v1818 = vcombine.high %v1808, %v1816
        %v1820 = vunpack.c.l.s4 1934713408
        %v1821 = vunpack.c.0.s8 %v1820
        %v1822 = vlaneseq
        %v1823 = vshrl.u32 %v1822, 7
        %v1824 = vsub.s32 %v1821, %v1823
        %v1825 = vrot.slane %v1817, %v1824
        %v1827 = vunpack.c.l.s4 1934713408
        %v1828 = vunpack.c.0.s8 %v1827
        %v1829 = vlaneseq
        %v1830 = vshrl.u32 %v1829, 7
        %v1831 = vsub.s32 %v1828, %v1830
        %v1832 = vrot.slane %v1818, %v1831
        %v1833 = vcombine.high %v1825, 0
        %v1834 = vcombine.high %v1832, 0
        %v1837 = vpack.i.b16 %v1757, %v1723
        %v1838 = vshrl.u32 %v1723, 16
        %v1839 = vshrl.u32 %v1757, 16
        %v1840 = vpack.i.b16 %v1839, %v1838
        %v1843 = vpack.i.b16 %v1765, %v1731
        %v1844 = vshrl.u32 %v1731, 16
        %v1845 = vshrl.u32 %v1765, 16
        %v1846 = vpack.i.b16 %v1845, %v1844
        %v1849 = vpack.i.b16 %v1764, %v1730
        %v1850 = vshrl.u32 %v1730, 16
        %v1851 = vshrl.u32 %v1764, 16
        %v1852 = vpack.i.b16 %v1851, %v1850
        %v1855 = vpack.i.b16 %v1766, %v1732
        %v1856 = vshrl.u32 %v1732, 16
        %v1857 = vshrl.u32 %v1766, 16
        %v1858 = vpack.i.b16 %v1857, %v1856
        %v1861 = vpack.i.b16 %v1825, %v1791
        %v1862 = vshrl.u32 %v1791, 16
        %v1863 = vshrl.u32 %v1825, 16
        %v1864 = vpack.i.b16 %v1863, %v1862
        %v1867 = vpack.i.b16 %v1833, %v1799
        %v1868 = vshrl.u32 %v1799, 16
        %v1869 = vshrl.u32 %v1833, 16
        %v1870 = vpack.i.b16 %v1869, %v1868
        %v1873 = vpack.i.b16 %v1832, %v1798
        %v1874 = vshrl.u32 %v1798, 16
        %v1875 = vshrl.u32 %v1832, 16
        %v1876 = vpack.i.b16 %v1875, %v1874
        %v1879 = vpack.i.b16 %v1834, %v1800
        %v1880 = vshrl.u32 %v1800, 16
        %v1881 = vshrl.u32 %v1834, 16
        %v1882 = vpack.i.b16 %v1881, %v1880
        %v1883 = vunpack.c.l.b16 %v1840
        %v1884 = vpack.c.b16 %v1883, %v1883
        %1885 = vrot.lane.b32.xlu0 %v1884, 16
        %v1886 = vpop.permute.xlu0 %1885
        %v1887 = vunpack.c.l.b16 %v1843
        %v1888 = vpack.c.b16 %v1887, %v1887
        %1889 = vrot.lane.b32.xlu0 %v1888, 32
        %v1890 = vpop.permute.xlu0 %1889
        %v1891 = vunpack.c.l.b16 %v1846
        %v1892 = vpack.c.b16 %v1891, %v1891
        %1893 = vrot.lane.b32.xlu0 %v1892, 48
        %v1894 = vpop.permute.xlu0 %1893
        %v1895 = vunpack.c.l.b16 %v1849
        %v1896 = vpack.c.b16 %v1895, %v1895
        %1897 = vrot.lane.b32.xlu0 %v1896, 64
        %v1898 = vpop.permute.xlu0 %1897
        %v1899 = vunpack.c.l.b16 %v1852
        %v1900 = vpack.c.b16 %v1899, %v1899
        %1901 = vrot.lane.b32.xlu0 %v1900, 80
        %v1902 = vpop.permute.xlu0 %1901
        %v1903 = vunpack.c.l.b16 %v1855
        %v1904 = vpack.c.b16 %v1903, %v1903
        %1905 = vrot.lane.b32.xlu0 %v1904, 96
        %v1906 = vpop.permute.xlu0 %1905
        %v1907 = vunpack.c.l.b16 %v1858
        %v1908 = vpack.c.b16 %v1907, %v1907
        %1909 = vrot.lane.b32.xlu0 %v1908, 112
        %v1910 = vpop.permute.xlu0 %1909
        %v1911 = vunpack.c.l.b16 %v1864
        %v1912 = vpack.c.b16 %v1911, %v1911
        %1913 = vrot.lane.b32.xlu0 %v1912, 16
        %v1914 = vpop.permute.xlu0 %1913
        %v1915 = vunpack.c.l.b16 %v1867
        %v1916 = vpack.c.b16 %v1915, %v1915
        %1917 = vrot.lane.b32.xlu0 %v1916, 32
        %v1918 = vpop.permute.xlu0 %1917
        %v1919 = vunpack.c.l.b16 %v1870
        %v1920 = vpack.c.b16 %v1919, %v1919
        %1921 = vrot.lane.b32.xlu0 %v1920, 48
        %v1922 = vpop.permute.xlu0 %1921
        %v1923 = vunpack.c.l.b16 %v1873
        %v1924 = vpack.c.b16 %v1923, %v1923
        %1925 = vrot.lane.b32.xlu0 %v1924, 64
        %v1926 = vpop.permute.xlu0 %1925
        %v1927 = vunpack.c.l.b16 %v1876
        %v1928 = vpack.c.b16 %v1927, %v1927
        %1929 = vrot.lane.b32.xlu0 %v1928, 80
        %v1930 = vpop.permute.xlu0 %1929
        %v1931 = vunpack.c.l.b16 %v1879
        %v1932 = vpack.c.b16 %v1931, %v1931
        %1933 = vrot.lane.b32.xlu0 %v1932, 96
        %v1934 = vpop.permute.xlu0 %1933
        %v1935 = vunpack.c.l.b16 %v1882
        %v1936 = vpack.c.b16 %v1935, %v1935
        %1937 = vrot.lane.b32.xlu0 %v1936, 112
        %v1938 = vpop.permute.xlu0 %1937
        %v1941 = vsel %vm481, %v1837, %v1886
        %v1943 = vsel %vm485, %v1941, %v1890
        %v1945 = vsel %vm488, %v1943, %v1894
        %v1947 = vsel %vm491, %v1945, %v1898
        %v1949 = vsel %vm494, %v1947, %v1902
        %v1951 = vsel %vm497, %v1949, %v1906
        %v1953 = vsel %vm500, %v1951, %v1910
        %v1956 = vsel %vm481, %v1861, %v1914
        %v1958 = vsel %vm485, %v1956, %v1918
        %v1960 = vsel %vm488, %v1958, %v1922
        %v1962 = vsel %vm491, %v1960, %v1926
        %v1964 = vsel %vm494, %v1962, %v1930
        %v1966 = vsel %vm497, %v1964, %v1934
        %v1968 = vsel %vm500, %v1966, %v1938
        %1969 = vrot.lane.b32.xlu0 %v1186, 126
        %v1970 = vpop.permute.xlu0 %1969
        %1971 = vrot.lane.b32.xlu0 %v1196, 126
        %v1972 = vpop.permute.xlu0 %1971
        %1973 = vrot.lane.b32.xlu0 %v1210, 126
        %v1974 = vpop.permute.xlu0 %1973
        %1975 = vrot.lane.b32.xlu0 %v1220, 126
        %v1976 = vpop.permute.xlu0 %1975
        %1977 = vrot.lane.b32.xlu0 %v1234, 126
        %v1978 = vpop.permute.xlu0 %1977
        %1979 = vrot.lane.b32.xlu0 %v1244, 126
        %v1980 = vpop.permute.xlu0 %1979
        %1981 = vrot.lane.b32.xlu0 %v1258, 126
        %v1982 = vpop.permute.xlu0 %1981
        %1983 = vrot.lane.b32.xlu0 %v1268, 126
        %v1984 = vpop.permute.xlu0 %1983
        %1985 = vrot.lane.b32.xlu0 %v1282, 126
        %v1986 = vpop.permute.xlu0 %1985
        %1987 = vrot.lane.b32.xlu0 %v1292, 126
        %v1988 = vpop.permute.xlu0 %1987
        %1989 = vrot.lane.b32.xlu0 %v1306, 126
        %v1990 = vpop.permute.xlu0 %1989
        %1991 = vrot.lane.b32.xlu0 %v1316, 126
        %v1992 = vpop.permute.xlu0 %1991
        %1993 = vrot.lane.b32.xlu0 %v1330, 126
        %v1994 = vpop.permute.xlu0 %1993
        %1995 = vrot.lane.b32.xlu0 %v1340, 126
        %v1996 = vpop.permute.xlu0 %1995
        %1997 = vrot.lane.b32.xlu0 %v1354, 126
        %v1998 = vpop.permute.xlu0 %1997
        %1999 = vrot.lane.b32.xlu0 %v1364, 126
        %v2000 = vpop.permute.xlu0 %1999
        %v2017 = vcombine.low %v1970, %v1986
        %v2019 = vunpack.c.l.s4 1983009808
        %v2020 = vunpack.c.0.s8 %v2019
        %v2021 = vlaneseq
        %v2022 = vshrl.u32 %v2021, 7
        %v2023 = vsub.s32 %v2020, %v2022
        %v2024 = vrot.slane %v2017, %v2023
        %v2025 = vcombine.low %v1978, %v1994
        %v2027 = vunpack.c.l.s4 1983009808
        %v2028 = vunpack.c.0.s8 %v2027
        %v2029 = vlaneseq
        %v2030 = vshrl.u32 %v2029, 7
        %v2031 = vsub.s32 %v2028, %v2030
        %v2032 = vrot.slane %v2025, %v2031
        %v2033 = vcombine.low %v2024, %v2032
        %v2034 = vcombine.high %v2024, %v2032
        %v2036 = vunpack.c.l.s4 1934713408
        %v2037 = vunpack.c.0.s8 %v2036
        %v2038 = vlaneseq
        %v2039 = vshrl.u32 %v2038, 7
        %v2040 = vsub.s32 %v2037, %v2039
        %v2041 = vrot.slane %v2033, %v2040
        %v2043 = vunpack.c.l.s4 1934713408
        %v2044 = vunpack.c.0.s8 %v2043
        %v2045 = vlaneseq
        %v2046 = vshrl.u32 %v2045, 7
        %v2047 = vsub.s32 %v2044, %v2046
        %v2048 = vrot.slane %v2034, %v2047
        %v2049 = vcombine.high %v2041, 0
        %v2050 = vcombine.high %v2048, 0
        %v2051 = vcombine.low %v1974, %v1990
        %v2053 = vunpack.c.l.s4 1983009808
        %v2054 = vunpack.c.0.s8 %v2053
        %v2055 = vlaneseq
        %v2056 = vshrl.u32 %v2055, 7
        %v2057 = vsub.s32 %v2054, %v2056
        %v2058 = vrot.slane %v2051, %v2057
        %v2059 = vcombine.low %v1982, %v1998
        %v2061 = vunpack.c.l.s4 1983009808
        %v2062 = vunpack.c.0.s8 %v2061
        %v2063 = vlaneseq
        %v2064 = vshrl.u32 %v2063, 7
        %v2065 = vsub.s32 %v2062, %v2064
        %v2066 = vrot.slane %v2059, %v2065
        %v2067 = vcombine.low %v2058, %v2066
        %v2068 = vcombine.high %v2058, %v2066
        %v2070 = vunpack.c.l.s4 1934713408
        %v2071 = vunpack.c.0.s8 %v2070
        %v2072 = vlaneseq
        %v2073 = vshrl.u32 %v2072, 7
        %v2074 = vsub.s32 %v2071, %v2073
        %v2075 = vrot.slane %v2067, %v2074
        %v2077 = vunpack.c.l.s4 1934713408
        %v2078 = vunpack.c.0.s8 %v2077
        %v2079 = vlaneseq
        %v2080 = vshrl.u32 %v2079, 7
        %v2081 = vsub.s32 %v2078, %v2080
        %v2082 = vrot.slane %v2068, %v2081
        %v2083 = vcombine.high %v2075, 0
        %v2084 = vcombine.high %v2082, 0
        %v2085 = vcombine.low %v1972, %v1988
        %v2087 = vunpack.c.l.s4 1983009808
        %v2088 = vunpack.c.0.s8 %v2087
        %v2089 = vlaneseq
        %v2090 = vshrl.u32 %v2089, 7
        %v2091 = vsub.s32 %v2088, %v2090
        %v2092 = vrot.slane %v2085, %v2091
        %v2093 = vcombine.low %v1980, %v1996
        %v2095 = vunpack.c.l.s4 1983009808
        %v2096 = vunpack.c.0.s8 %v2095
        %v2097 = vlaneseq
        %v2098 = vshrl.u32 %v2097, 7
        %v2099 = vsub.s32 %v2096, %v2098
        %v2100 = vrot.slane %v2093, %v2099
        %v2101 = vcombine.low %v2092, %v2100
        %v2102 = vcombine.high %v2092, %v2100
        %v2104 = vunpack.c.l.s4 1934713408
        %v2105 = vunpack.c.0.s8 %v2104
        %v2106 = vlaneseq
        %v2107 = vshrl.u32 %v2106, 7
        %v2108 = vsub.s32 %v2105, %v2107
        %v2109 = vrot.slane %v2101, %v2108
        %v2111 = vunpack.c.l.s4 1934713408
        %v2112 = vunpack.c.0.s8 %v2111
        %v2113 = vlaneseq
        %v2114 = vshrl.u32 %v2113, 7
        %v2115 = vsub.s32 %v2112, %v2114
        %v2116 = vrot.slane %v2102, %v2115
        %v2117 = vcombine.high %v2109, 0
        %v2118 = vcombine.high %v2116, 0
        %v2119 = vcombine.low %v1976, %v1992
        %v2121 = vunpack.c.l.s4 1983009808
        %v2122 = vunpack.c.0.s8 %v2121
        %v2123 = vlaneseq
        %v2124 = vshrl.u32 %v2123, 7
        %v2125 = vsub.s32 %v2122, %v2124
        %v2126 = vrot.slane %v2119, %v2125
        %v2127 = vcombine.low %v1984, %v2000
        %v2129 = vunpack.c.l.s4 1983009808
        %v2130 = vunpack.c.0.s8 %v2129
        %v2131 = vlaneseq
        %v2132 = vshrl.u32 %v2131, 7
        %v2133 = vsub.s32 %v2130, %v2132
        %v2134 = vrot.slane %v2127, %v2133
        %v2135 = vcombine.low %v2126, %v2134
        %v2136 = vcombine.high %v2126, %v2134
        %v2138 = vunpack.c.l.s4 1934713408
        %v2139 = vunpack.c.0.s8 %v2138
        %v2140 = vlaneseq
        %v2141 = vshrl.u32 %v2140, 7
        %v2142 = vsub.s32 %v2139, %v2141
        %v2143 = vrot.slane %v2135, %v2142
        %v2145 = vunpack.c.l.s4 1934713408
        %v2146 = vunpack.c.0.s8 %v2145
        %v2147 = vlaneseq
        %v2148 = vshrl.u32 %v2147, 7
        %v2149 = vsub.s32 %v2146, %v2148
        %v2150 = vrot.slane %v2136, %v2149
        %v2151 = vcombine.high %v2143, 0
        %v2152 = vcombine.high %v2150, 0
        %v2155 = vpack.i.b16 %v2075, %v2041
        %v2156 = vshrl.u32 %v2041, 16
        %v2157 = vshrl.u32 %v2075, 16
        %v2158 = vpack.i.b16 %v2157, %v2156
        %v2161 = vpack.i.b16 %v2083, %v2049
        %v2162 = vshrl.u32 %v2049, 16
        %v2163 = vshrl.u32 %v2083, 16
        %v2164 = vpack.i.b16 %v2163, %v2162
        %v2167 = vpack.i.b16 %v2082, %v2048
        %v2168 = vshrl.u32 %v2048, 16
        %v2169 = vshrl.u32 %v2082, 16
        %v2170 = vpack.i.b16 %v2169, %v2168
        %v2173 = vpack.i.b16 %v2084, %v2050
        %v2174 = vshrl.u32 %v2050, 16
        %v2175 = vshrl.u32 %v2084, 16
        %v2176 = vpack.i.b16 %v2175, %v2174
        %v2179 = vpack.i.b16 %v2143, %v2109
        %v2180 = vshrl.u32 %v2109, 16
        %v2181 = vshrl.u32 %v2143, 16
        %v2182 = vpack.i.b16 %v2181, %v2180
        %v2185 = vpack.i.b16 %v2151, %v2117
        %v2186 = vshrl.u32 %v2117, 16
        %v2187 = vshrl.u32 %v2151, 16
        %v2188 = vpack.i.b16 %v2187, %v2186
        %v2191 = vpack.i.b16 %v2150, %v2116
        %v2192 = vshrl.u32 %v2116, 16
        %v2193 = vshrl.u32 %v2150, 16
        %v2194 = vpack.i.b16 %v2193, %v2192
        %v2197 = vpack.i.b16 %v2152, %v2118
        %v2198 = vshrl.u32 %v2118, 16
        %v2199 = vshrl.u32 %v2152, 16
        %v2200 = vpack.i.b16 %v2199, %v2198
        %v2201 = vunpack.c.l.b16 %v2158
        %v2202 = vpack.c.b16 %v2201, %v2201
        %2203 = vrot.lane.b32.xlu0 %v2202, 16
        %v2204 = vpop.permute.xlu0 %2203
        %v2205 = vunpack.c.l.b16 %v2161
        %v2206 = vpack.c.b16 %v2205, %v2205
        %2207 = vrot.lane.b32.xlu0 %v2206, 32
        %v2208 = vpop.permute.xlu0 %2207
        %v2209 = vunpack.c.l.b16 %v2164
        %v2210 = vpack.c.b16 %v2209, %v2209
        %2211 = vrot.lane.b32.xlu0 %v2210, 48
        %v2212 = vpop.permute.xlu0 %2211
        %v2213 = vunpack.c.l.b16 %v2167
        %v2214 = vpack.c.b16 %v2213, %v2213
        %2215 = vrot.lane.b32.xlu0 %v2214, 64
        %v2216 = vpop.permute.xlu0 %2215
        %v2217 = vunpack.c.l.b16 %v2170
        %v2218 = vpack.c.b16 %v2217, %v2217
        %2219 = vrot.lane.b32.xlu0 %v2218, 80
        %v2220 = vpop.permute.xlu0 %2219
        %v2221 = vunpack.c.l.b16 %v2173
        %v2222 = vpack.c.b16 %v2221, %v2221
        %2223 = vrot.lane.b32.xlu0 %v2222, 96
        %v2224 = vpop.permute.xlu0 %2223
        %v2225 = vunpack.c.l.b16 %v2176
        %v2226 = vpack.c.b16 %v2225, %v2225
        %2227 = vrot.lane.b32.xlu0 %v2226, 112
        %v2228 = vpop.permute.xlu0 %2227
        %v2229 = vunpack.c.l.b16 %v2182
        %v2230 = vpack.c.b16 %v2229, %v2229
        %2231 = vrot.lane.b32.xlu0 %v2230, 16
        %v2232 = vpop.permute.xlu0 %2231
        %v2233 = vunpack.c.l.b16 %v2185
        %v2234 = vpack.c.b16 %v2233, %v2233
        %2235 = vrot.lane.b32.xlu0 %v2234, 32
        %v2236 = vpop.permute.xlu0 %2235
        %v2237 = vunpack.c.l.b16 %v2188
        %v2238 = vpack.c.b16 %v2237, %v2237
        %2239 = vrot.lane.b32.xlu0 %v2238, 48
        %v2240 = vpop.permute.xlu0 %2239
        %v2241 = vunpack.c.l.b16 %v2191
        %v2242 = vpack.c.b16 %v2241, %v2241
        %2243 = vrot.lane.b32.xlu0 %v2242, 64
        %v2244 = vpop.permute.xlu0 %2243
        %v2245 = vunpack.c.l.b16 %v2194
        %v2246 = vpack.c.b16 %v2245, %v2245
        %2247 = vrot.lane.b32.xlu0 %v2246, 80
        %v2248 = vpop.permute.xlu0 %2247
        %v2249 = vunpack.c.l.b16 %v2197
        %v2250 = vpack.c.b16 %v2249, %v2249
        %2251 = vrot.lane.b32.xlu0 %v2250, 96
        %v2252 = vpop.permute.xlu0 %2251
        %v2253 = vunpack.c.l.b16 %v2200
        %v2254 = vpack.c.b16 %v2253, %v2253
        %2255 = vrot.lane.b32.xlu0 %v2254, 112
        %v2256 = vpop.permute.xlu0 %2255
        %v2259 = vsel %vm481, %v2155, %v2204
        %v2261 = vsel %vm485, %v2259, %v2208
        %v2263 = vsel %vm488, %v2261, %v2212
        %v2265 = vsel %vm491, %v2263, %v2216
        %v2267 = vsel %vm494, %v2265, %v2220
        %v2269 = vsel %vm497, %v2267, %v2224
        %v2271 = vsel %vm500, %v2269, %v2228
        %v2274 = vsel %vm481, %v2179, %v2232
        %v2276 = vsel %vm485, %v2274, %v2236
        %v2278 = vsel %vm488, %v2276, %v2240
        %v2280 = vsel %vm491, %v2278, %v2244
        %v2282 = vsel %vm494, %v2280, %v2248
        %v2284 = vsel %vm497, %v2282, %v2252
        %v2286 = vsel %vm500, %v2284, %v2256
        %vm2295 = vcmask 1042432
        %vm2296 = vcmask 1046532
        %vm2297 = vmor %vm2295, %vm2296
        %v2298 = vrot.slane %v217, 5
        %v2299 = vrot.slane %v2298, 4
        %v2300 = vrot.slane %v218, 5
        %v2301 = vsel %vm2297, %v2299, %v2300
        %v2302 = vrot.slane %v2300, 4
        %v2303 = vrot.slane %v219, 5
        %v2304 = vsel %vm2297, %v2302, %v2303
        %v2305 = vrot.slane %v220, 5
        %v2306 = vrot.slane %v2305, 4
        %v2307 = vrot.slane %v221, 5
        %v2308 = vsel %vm2297, %v2306, %v2307
        %v2309 = vrot.slane %v2307, 4
        %v2310 = vrot.slane %v222, 5
        %v2311 = vsel %vm2297, %v2309, %v2310
        %v2312 = vrot.slane %v223, 5
        %v2313 = vrot.slane %v2312, 4
        %v2314 = vrot.slane %v224, 5
        %v2315 = vsel %vm2297, %v2313, %v2314
        %v2316 = vrot.slane %v2314, 4
        %v2317 = vrot.slane %v225, 5
        %v2318 = vsel %vm2297, %v2316, %v2317
        %v2319 = vrot.slane %v226, 5
        %v2320 = vrot.slane %v2319, 4
        %v2321 = vrot.slane %v227, 5
        %v2322 = vsel %vm2297, %v2320, %v2321
        %v2323 = vrot.slane %v2321, 4
        %v2324 = vrot.slane %v228, 5
        %v2325 = vsel %vm2297, %v2323, %v2324
        %v2326 = vrot.slane %v229, 5
        %v2327 = vrot.slane %v2326, 4
        %v2328 = vrot.slane %v230, 5
        %v2329 = vsel %vm2297, %v2327, %v2328
        %v2330 = vrot.slane %v2328, 4
        %v2331 = vrot.slane %v231, 5
        %v2332 = vsel %vm2297, %v2330, %v2331
        %v2333 = vrot.slane %v232, 5
        %v2334 = vrot.slane %v2333, 4
        %v2335 = vrot.slane %v233, 5
        %v2336 = vsel %vm2297, %v2334, %v2335
        %v2337 = vrot.slane %v2335, 4
        %v2338 = vrot.slane %v234, 5
        %v2339 = vsel %vm2297, %v2337, %v2338
        %v2340 = vrot.slane %v235, 5
        %v2341 = vrot.slane %v2340, 4
        %v2342 = vrot.slane %v236, 5
        %v2343 = vsel %vm2297, %v2341, %v2342
        %v2344 = vrot.slane %v2342, 4
        %v2345 = vrot.slane %v237, 5
        %v2346 = vsel %vm2297, %v2344, %v2345
        %v2347 = vrot.slane %v238, 5
        %v2348 = vrot.slane %v2347, 4
        %v2349 = vrot.slane %v239, 5
        %v2350 = vsel %vm2297, %v2348, %v2349
        %v2351 = vrot.slane %v2349, 4
        %v2352 = vrot.slane %v240, 5
        %v2353 = vsel %vm2297, %v2351, %v2352
        %v2370 = vcombine.low %v2301, %v2329
        %v2372 = vunpack.c.l.s4 1983009808
        %v2373 = vunpack.c.0.s8 %v2372
        %v2374 = vlaneseq
        %v2375 = vshrl.u32 %v2374, 7
        %v2376 = vsub.s32 %v2373, %v2375
        %v2377 = vrot.slane %v2370, %v2376
        %v2378 = vcombine.low %v2315, %v2343
        %v2380 = vunpack.c.l.s4 1983009808
        %v2381 = vunpack.c.0.s8 %v2380
        %v2382 = vlaneseq
        %v2383 = vshrl.u32 %v2382, 7
        %v2384 = vsub.s32 %v2381, %v2383
        %v2385 = vrot.slane %v2378, %v2384
        %v2386 = vcombine.low %v2377, %v2385
        %v2387 = vcombine.high %v2377, %v2385
        %v2389 = vunpack.c.l.s4 1934713408
        %v2390 = vunpack.c.0.s8 %v2389
        %v2391 = vlaneseq
        %v2392 = vshrl.u32 %v2391, 7
        %v2393 = vsub.s32 %v2390, %v2392
        %v2394 = vrot.slane %v2386, %v2393
        %v2396 = vunpack.c.l.s4 1934713408
        %v2397 = vunpack.c.0.s8 %v2396
        %v2398 = vlaneseq
        %v2399 = vshrl.u32 %v2398, 7
        %v2400 = vsub.s32 %v2397, %v2399
        %v2401 = vrot.slane %v2387, %v2400
        %v2402 = vcombine.high %v2394, 0
        %v2403 = vcombine.high %v2401, 0
        %v2404 = vcombine.low %v2308, %v2336
        %v2406 = vunpack.c.l.s4 1983009808
        %v2407 = vunpack.c.0.s8 %v2406
        %v2408 = vlaneseq
        %v2409 = vshrl.u32 %v2408, 7
        %v2410 = vsub.s32 %v2407, %v2409
        %v2411 = vrot.slane %v2404, %v2410
        %v2412 = vcombine.low %v2322, %v2350
        %v2414 = vunpack.c.l.s4 1983009808
        %v2415 = vunpack.c.0.s8 %v2414
        %v2416 = vlaneseq
        %v2417 = vshrl.u32 %v2416, 7
        %v2418 = vsub.s32 %v2415, %v2417
        %v2419 = vrot.slane %v2412, %v2418
        %v2420 = vcombine.low %v2411, %v2419
        %v2421 = vcombine.high %v2411, %v2419
        %v2423 = vunpack.c.l.s4 1934713408
        %v2424 = vunpack.c.0.s8 %v2423
        %v2425 = vlaneseq
        %v2426 = vshrl.u32 %v2425, 7
        %v2427 = vsub.s32 %v2424, %v2426
        %v2428 = vrot.slane %v2420, %v2427
        %v2430 = vunpack.c.l.s4 1934713408
        %v2431 = vunpack.c.0.s8 %v2430
        %v2432 = vlaneseq
        %v2433 = vshrl.u32 %v2432, 7
        %v2434 = vsub.s32 %v2431, %v2433
        %v2435 = vrot.slane %v2421, %v2434
        %v2436 = vcombine.high %v2428, 0
        %v2437 = vcombine.high %v2435, 0
        %v2438 = vcombine.low %v2304, %v2332
        %v2440 = vunpack.c.l.s4 1983009808
        %v2441 = vunpack.c.0.s8 %v2440
        %v2442 = vlaneseq
        %v2443 = vshrl.u32 %v2442, 7
        %v2444 = vsub.s32 %v2441, %v2443
        %v2445 = vrot.slane %v2438, %v2444
        %v2446 = vcombine.low %v2318, %v2346
        %v2448 = vunpack.c.l.s4 1983009808
        %v2449 = vunpack.c.0.s8 %v2448
        %v2450 = vlaneseq
        %v2451 = vshrl.u32 %v2450, 7
        %v2452 = vsub.s32 %v2449, %v2451
        %v2453 = vrot.slane %v2446, %v2452
        %v2454 = vcombine.low %v2445, %v2453
        %v2455 = vcombine.high %v2445, %v2453
        %v2457 = vunpack.c.l.s4 1934713408
        %v2458 = vunpack.c.0.s8 %v2457
        %v2459 = vlaneseq
        %v2460 = vshrl.u32 %v2459, 7
        %v2461 = vsub.s32 %v2458, %v2460
        %v2462 = vrot.slane %v2454, %v2461
        %v2464 = vunpack.c.l.s4 1934713408
        %v2465 = vunpack.c.0.s8 %v2464
        %v2466 = vlaneseq
        %v2467 = vshrl.u32 %v2466, 7
        %v2468 = vsub.s32 %v2465, %v2467
        %v2469 = vrot.slane %v2455, %v2468
        %v2470 = vcombine.high %v2462, 0
        %v2471 = vcombine.high %v2469, 0
        %v2472 = vcombine.low %v2311, %v2339
        %v2474 = vunpack.c.l.s4 1983009808
        %v2475 = vunpack.c.0.s8 %v2474
        %v2476 = vlaneseq
        %v2477 = vshrl.u32 %v2476, 7
        %v2478 = vsub.s32 %v2475, %v2477
        %v2479 = vrot.slane %v2472, %v2478
        %v2480 = vcombine.low %v2325, %v2353
        %v2482 = vunpack.c.l.s4 1983009808
        %v2483 = vunpack.c.0.s8 %v2482
        %v2484 = vlaneseq
        %v2485 = vshrl.u32 %v2484, 7
        %v2486 = vsub.s32 %v2483, %v2485
        %v2487 = vrot.slane %v2480, %v2486
        %v2488 = vcombine.low %v2479, %v2487
        %v2489 = vcombine.high %v2479, %v2487
        %v2491 = vunpack.c.l.s4 1934713408
        %v2492 = vunpack.c.0.s8 %v2491
        %v2493 = vlaneseq
        %v2494 = vshrl.u32 %v2493, 7
        %v2495 = vsub.s32 %v2492, %v2494
        %v2496 = vrot.slane %v2488, %v2495
        %v2498 = vunpack.c.l.s4 1934713408
        %v2499 = vunpack.c.0.s8 %v2498
        %v2500 = vlaneseq
        %v2501 = vshrl.u32 %v2500, 7
        %v2502 = vsub.s32 %v2499, %v2501
        %v2503 = vrot.slane %v2489, %v2502
        %v2504 = vcombine.high %v2496, 0
        %v2505 = vcombine.high %v2503, 0
        %v2508 = vpack.i.b16 %v2428, %v2394
        %v2509 = vshrl.u32 %v2394, 16
        %v2510 = vshrl.u32 %v2428, 16
        %v2511 = vpack.i.b16 %v2510, %v2509
        %v2514 = vpack.i.b16 %v2436, %v2402
        %v2515 = vshrl.u32 %v2402, 16
        %v2516 = vshrl.u32 %v2436, 16
        %v2517 = vpack.i.b16 %v2516, %v2515
        %v2520 = vpack.i.b16 %v2435, %v2401
        %v2521 = vshrl.u32 %v2401, 16
        %v2522 = vshrl.u32 %v2435, 16
        %v2523 = vpack.i.b16 %v2522, %v2521
        %v2526 = vpack.i.b16 %v2437, %v2403
        %v2527 = vshrl.u32 %v2403, 16
        %v2528 = vshrl.u32 %v2437, 16
        %v2529 = vpack.i.b16 %v2528, %v2527
        %v2532 = vpack.i.b16 %v2496, %v2462
        %v2533 = vshrl.u32 %v2462, 16
        %v2534 = vshrl.u32 %v2496, 16
        %v2535 = vpack.i.b16 %v2534, %v2533
        %v2538 = vpack.i.b16 %v2504, %v2470
        %v2539 = vshrl.u32 %v2470, 16
        %v2540 = vshrl.u32 %v2504, 16
        %v2541 = vpack.i.b16 %v2540, %v2539
        %v2544 = vpack.i.b16 %v2503, %v2469
        %v2545 = vshrl.u32 %v2469, 16
        %v2546 = vshrl.u32 %v2503, 16
        %v2547 = vpack.i.b16 %v2546, %v2545
        %v2550 = vpack.i.b16 %v2505, %v2471
        %v2551 = vshrl.u32 %v2471, 16
        %v2552 = vshrl.u32 %v2505, 16
        %v2553 = vpack.i.b16 %v2552, %v2551
        %v2554 = vunpack.c.l.b16 %v2511
        %v2555 = vpack.c.b16 %v2554, %v2554
        %2556 = vrot.lane.b32.xlu0 %v2555, 16
        %v2557 = vpop.permute.xlu0 %2556
        %v2558 = vunpack.c.l.b16 %v2514
        %v2559 = vpack.c.b16 %v2558, %v2558
        %2560 = vrot.lane.b32.xlu0 %v2559, 32
        %v2561 = vpop.permute.xlu0 %2560
        %v2562 = vunpack.c.l.b16 %v2517
        %v2563 = vpack.c.b16 %v2562, %v2562
        %2564 = vrot.lane.b32.xlu0 %v2563, 48
        %v2565 = vpop.permute.xlu0 %2564
        %v2566 = vunpack.c.l.b16 %v2520
        %v2567 = vpack.c.b16 %v2566, %v2566
        %2568 = vrot.lane.b32.xlu0 %v2567, 64
        %v2569 = vpop.permute.xlu0 %2568
        %v2570 = vunpack.c.l.b16 %v2523
        %v2571 = vpack.c.b16 %v2570, %v2570
        %2572 = vrot.lane.b32.xlu0 %v2571, 80
        %v2573 = vpop.permute.xlu0 %2572
        %v2574 = vunpack.c.l.b16 %v2526
        %v2575 = vpack.c.b16 %v2574, %v2574
        %2576 = vrot.lane.b32.xlu0 %v2575, 96
        %v2577 = vpop.permute.xlu0 %2576
        %v2578 = vunpack.c.l.b16 %v2529
        %v2579 = vpack.c.b16 %v2578, %v2578
        %2580 = vrot.lane.b32.xlu0 %v2579, 112
        %v2581 = vpop.permute.xlu0 %2580
        %v2582 = vunpack.c.l.b16 %v2535
        %v2583 = vpack.c.b16 %v2582, %v2582
        %2584 = vrot.lane.b32.xlu0 %v2583, 16
        %v2585 = vpop.permute.xlu0 %2584
        %v2586 = vunpack.c.l.b16 %v2538
        %v2587 = vpack.c.b16 %v2586, %v2586
        %2588 = vrot.lane.b32.xlu0 %v2587, 32
        %v2589 = vpop.permute.xlu0 %2588
        %v2590 = vunpack.c.l.b16 %v2541
        %v2591 = vpack.c.b16 %v2590, %v2590
        %2592 = vrot.lane.b32.xlu0 %v2591, 48
        %v2593 = vpop.permute.xlu0 %2592
        %v2594 = vunpack.c.l.b16 %v2544
        %v2595 = vpack.c.b16 %v2594, %v2594
        %2596 = vrot.lane.b32.xlu0 %v2595, 64
        %v2597 = vpop.permute.xlu0 %2596
        %v2598 = vunpack.c.l.b16 %v2547
        %v2599 = vpack.c.b16 %v2598, %v2598
        %2600 = vrot.lane.b32.xlu0 %v2599, 80
        %v2601 = vpop.permute.xlu0 %2600
        %v2602 = vunpack.c.l.b16 %v2550
        %v2603 = vpack.c.b16 %v2602, %v2602
        %2604 = vrot.lane.b32.xlu0 %v2603, 96
        %v2605 = vpop.permute.xlu0 %2604
        %v2606 = vunpack.c.l.b16 %v2553
        %v2607 = vpack.c.b16 %v2606, %v2606
        %2608 = vrot.lane.b32.xlu0 %v2607, 112
        %v2609 = vpop.permute.xlu0 %2608
        %v2612 = vsel %vm481, %v2508, %v2557
        %v2614 = vsel %vm485, %v2612, %v2561
        %v2616 = vsel %vm488, %v2614, %v2565
        %v2618 = vsel %vm491, %v2616, %v2569
        %v2620 = vsel %vm494, %v2618, %v2573
        %v2622 = vsel %vm497, %v2620, %v2577
        %v2624 = vsel %vm500, %v2622, %v2581
        %v2627 = vsel %vm481, %v2532, %v2585
        %v2629 = vsel %vm485, %v2627, %v2589
        %v2631 = vsel %vm488, %v2629, %v2593
        %v2633 = vsel %vm491, %v2631, %v2597
        %v2635 = vsel %vm494, %v2633, %v2601
        %v2637 = vsel %vm497, %v2635, %v2605
        %v2639 = vsel %vm500, %v2637, %v2609
        %2640 = vrot.lane.b32.xlu0 %v2301, 127
        %v2641 = vpop.permute.xlu0 %2640
        %2642 = vrot.lane.b32.xlu0 %v2304, 127
        %v2643 = vpop.permute.xlu0 %2642
        %2644 = vrot.lane.b32.xlu0 %v2308, 127
        %v2645 = vpop.permute.xlu0 %2644
        %2646 = vrot.lane.b32.xlu0 %v2311, 127
        %v2647 = vpop.permute.xlu0 %2646
        %2648 = vrot.lane.b32.xlu0 %v2315, 127
        %v2649 = vpop.permute.xlu0 %2648
        %2650 = vrot.lane.b32.xlu0 %v2318, 127
        %v2651 = vpop.permute.xlu0 %2650
        %2652 = vrot.lane.b32.xlu0 %v2322, 127
        %v2653 = vpop.permute.xlu0 %2652
        %2654 = vrot.lane.b32.xlu0 %v2325, 127
        %v2655 = vpop.permute.xlu0 %2654
        %2656 = vrot.lane.b32.xlu0 %v2329, 127
        %v2657 = vpop.permute.xlu0 %2656
        %2658 = vrot.lane.b32.xlu0 %v2332, 127
        %v2659 = vpop.permute.xlu0 %2658
        %2660 = vrot.lane.b32.xlu0 %v2336, 127
        %v2661 = vpop.permute.xlu0 %2660
        %2662 = vrot.lane.b32.xlu0 %v2339, 127
        %v2663 = vpop.permute.xlu0 %2662
        %2664 = vrot.lane.b32.xlu0 %v2343, 127
        %v2665 = vpop.permute.xlu0 %2664
        %2666 = vrot.lane.b32.xlu0 %v2346, 127
        %v2667 = vpop.permute.xlu0 %2666
        %2668 = vrot.lane.b32.xlu0 %v2350, 127
        %v2669 = vpop.permute.xlu0 %2668
        %2670 = vrot.lane.b32.xlu0 %v2353, 127
        %v2671 = vpop.permute.xlu0 %2670
        %v2688 = vcombine.low %v2641, %v2657
        %v2690 = vunpack.c.l.s4 1983009808
        %v2691 = vunpack.c.0.s8 %v2690
        %v2692 = vlaneseq
        %v2693 = vshrl.u32 %v2692, 7
        %v2694 = vsub.s32 %v2691, %v2693
        %v2695 = vrot.slane %v2688, %v2694
        %v2696 = vcombine.low %v2649, %v2665
        %v2698 = vunpack.c.l.s4 1983009808
        %v2699 = vunpack.c.0.s8 %v2698
        %v2700 = vlaneseq
        %v2701 = vshrl.u32 %v2700, 7
        %v2702 = vsub.s32 %v2699, %v2701
        %v2703 = vrot.slane %v2696, %v2702
        %v2704 = vcombine.low %v2695, %v2703
        %v2705 = vcombine.high %v2695, %v2703
        %v2707 = vunpack.c.l.s4 1934713408
        %v2708 = vunpack.c.0.s8 %v2707
        %v2709 = vlaneseq
        %v2710 = vshrl.u32 %v2709, 7
        %v2711 = vsub.s32 %v2708, %v2710
        %v2712 = vrot.slane %v2704, %v2711
        %v2714 = vunpack.c.l.s4 1934713408
        %v2715 = vunpack.c.0.s8 %v2714
        %v2716 = vlaneseq
        %v2717 = vshrl.u32 %v2716, 7
        %v2718 = vsub.s32 %v2715, %v2717
        %v2719 = vrot.slane %v2705, %v2718
        %v2720 = vcombine.high %v2712, 0
        %v2721 = vcombine.high %v2719, 0
        %v2722 = vcombine.low %v2645, %v2661
        %v2724 = vunpack.c.l.s4 1983009808
        %v2725 = vunpack.c.0.s8 %v2724
        %v2726 = vlaneseq
        %v2727 = vshrl.u32 %v2726, 7
        %v2728 = vsub.s32 %v2725, %v2727
        %v2729 = vrot.slane %v2722, %v2728
        %v2730 = vcombine.low %v2653, %v2669
        %v2732 = vunpack.c.l.s4 1983009808
        %v2733 = vunpack.c.0.s8 %v2732
        %v2734 = vlaneseq
        %v2735 = vshrl.u32 %v2734, 7
        %v2736 = vsub.s32 %v2733, %v2735
        %v2737 = vrot.slane %v2730, %v2736
        %v2738 = vcombine.low %v2729, %v2737
        %v2739 = vcombine.high %v2729, %v2737
        %v2741 = vunpack.c.l.s4 1934713408
        %v2742 = vunpack.c.0.s8 %v2741
        %v2743 = vlaneseq
        %v2744 = vshrl.u32 %v2743, 7
        %v2745 = vsub.s32 %v2742, %v2744
        %v2746 = vrot.slane %v2738, %v2745
        %v2748 = vunpack.c.l.s4 1934713408
        %v2749 = vunpack.c.0.s8 %v2748
        %v2750 = vlaneseq
        %v2751 = vshrl.u32 %v2750, 7
        %v2752 = vsub.s32 %v2749, %v2751
        %v2753 = vrot.slane %v2739, %v2752
        %v2754 = vcombine.high %v2746, 0
        %v2755 = vcombine.high %v2753, 0
        %v2756 = vcombine.low %v2643, %v2659
        %v2758 = vunpack.c.l.s4 1983009808
        %v2759 = vunpack.c.0.s8 %v2758
        %v2760 = vlaneseq
        %v2761 = vshrl.u32 %v2760, 7
        %v2762 = vsub.s32 %v2759, %v2761
        %v2763 = vrot.slane %v2756, %v2762
        %v2764 = vcombine.low %v2651, %v2667
        %v2766 = vunpack.c.l.s4 1983009808
        %v2767 = vunpack.c.0.s8 %v2766
        %v2768 = vlaneseq
        %v2769 = vshrl.u32 %v2768, 7
        %v2770 = vsub.s32 %v2767, %v2769
        %v2771 = vrot.slane %v2764, %v2770
        %v2772 = vcombine.low %v2763, %v2771
        %v2773 = vcombine.high %v2763, %v2771
        %v2775 = vunpack.c.l.s4 1934713408
        %v2776 = vunpack.c.0.s8 %v2775
        %v2777 = vlaneseq
        %v2778 = vshrl.u32 %v2777, 7
        %v2779 = vsub.s32 %v2776, %v2778
        %v2780 = vrot.slane %v2772, %v2779
        %v2782 = vunpack.c.l.s4 1934713408
        %v2783 = vunpack.c.0.s8 %v2782
        %v2784 = vlaneseq
        %v2785 = vshrl.u32 %v2784, 7
        %v2786 = vsub.s32 %v2783, %v2785
        %v2787 = vrot.slane %v2773, %v2786
        %v2788 = vcombine.high %v2780, 0
        %v2789 = vcombine.high %v2787, 0
        %v2790 = vcombine.low %v2647, %v2663
        %v2792 = vunpack.c.l.s4 1983009808
        %v2793 = vunpack.c.0.s8 %v2792
        %v2794 = vlaneseq
        %v2795 = vshrl.u32 %v2794, 7
        %v2796 = vsub.s32 %v2793, %v2795
        %v2797 = vrot.slane %v2790, %v2796
        %v2798 = vcombine.low %v2655, %v2671
        %v2800 = vunpack.c.l.s4 1983009808
        %v2801 = vunpack.c.0.s8 %v2800
        %v2802 = vlaneseq
        %v2803 = vshrl.u32 %v2802, 7
        %v2804 = vsub.s32 %v2801, %v2803
        %v2805 = vrot.slane %v2798, %v2804
        %v2806 = vcombine.low %v2797, %v2805
        %v2807 = vcombine.high %v2797, %v2805
        %v2809 = vunpack.c.l.s4 1934713408
        %v2810 = vunpack.c.0.s8 %v2809
        %v2811 = vlaneseq
        %v2812 = vshrl.u32 %v2811, 7
        %v2813 = vsub.s32 %v2810, %v2812
        %v2814 = vrot.slane %v2806, %v2813
        %v2816 = vunpack.c.l.s4 1934713408
        %v2817 = vunpack.c.0.s8 %v2816
        %v2818 = vlaneseq
        %v2819 = vshrl.u32 %v2818, 7
        %v2820 = vsub.s32 %v2817, %v2819
        %v2821 = vrot.slane %v2807, %v2820
        %v2822 = vcombine.high %v2814, 0
        %v2823 = vcombine.high %v2821, 0
        %v2826 = vpack.i.b16 %v2746, %v2712
        %v2827 = vshrl.u32 %v2712, 16
        %v2828 = vshrl.u32 %v2746, 16
        %v2829 = vpack.i.b16 %v2828, %v2827
        %v2832 = vpack.i.b16 %v2754, %v2720
        %v2833 = vshrl.u32 %v2720, 16
        %v2834 = vshrl.u32 %v2754, 16
        %v2835 = vpack.i.b16 %v2834, %v2833
        %v2838 = vpack.i.b16 %v2753, %v2719
        %v2839 = vshrl.u32 %v2719, 16
        %v2840 = vshrl.u32 %v2753, 16
        %v2841 = vpack.i.b16 %v2840, %v2839
        %v2844 = vpack.i.b16 %v2755, %v2721
        %v2845 = vshrl.u32 %v2721, 16
        %v2846 = vshrl.u32 %v2755, 16
        %v2847 = vpack.i.b16 %v2846, %v2845
        %v2850 = vpack.i.b16 %v2814, %v2780
        %v2851 = vshrl.u32 %v2780, 16
        %v2852 = vshrl.u32 %v2814, 16
        %v2853 = vpack.i.b16 %v2852, %v2851
        %v2856 = vpack.i.b16 %v2822, %v2788
        %v2857 = vshrl.u32 %v2788, 16
        %v2858 = vshrl.u32 %v2822, 16
        %v2859 = vpack.i.b16 %v2858, %v2857
        %v2862 = vpack.i.b16 %v2821, %v2787
        %v2863 = vshrl.u32 %v2787, 16
        %v2864 = vshrl.u32 %v2821, 16
        %v2865 = vpack.i.b16 %v2864, %v2863
        %v2868 = vpack.i.b16 %v2823, %v2789
        %v2869 = vshrl.u32 %v2789, 16
        %v2870 = vshrl.u32 %v2823, 16
        %v2871 = vpack.i.b16 %v2870, %v2869
        %v2872 = vunpack.c.l.b16 %v2829
        %v2873 = vpack.c.b16 %v2872, %v2872
        %2874 = vrot.lane.b32.xlu0 %v2873, 16
        %v2875 = vpop.permute.xlu0 %2874
        %v2876 = vunpack.c.l.b16 %v2832
        %v2877 = vpack.c.b16 %v2876, %v2876
        %2878 = vrot.lane.b32.xlu0 %v2877, 32
        %v2879 = vpop.permute.xlu0 %2878
        %v2880 = vunpack.c.l.b16 %v2835
        %v2881 = vpack.c.b16 %v2880, %v2880
        %2882 = vrot.lane.b32.xlu0 %v2881, 48
        %v2883 = vpop.permute.xlu0 %2882
        %v2884 = vunpack.c.l.b16 %v2838
        %v2885 = vpack.c.b16 %v2884, %v2884
        %2886 = vrot.lane.b32.xlu0 %v2885, 64
        %v2887 = vpop.permute.xlu0 %2886
        %v2888 = vunpack.c.l.b16 %v2841
        %v2889 = vpack.c.b16 %v2888, %v2888
        %2890 = vrot.lane.b32.xlu0 %v2889, 80
        %v2891 = vpop.permute.xlu0 %2890
        %v2892 = vunpack.c.l.b16 %v2844
        %v2893 = vpack.c.b16 %v2892, %v2892
        %2894 = vrot.lane.b32.xlu0 %v2893, 96
        %v2895 = vpop.permute.xlu0 %2894
        %v2896 = vunpack.c.l.b16 %v2847
        %v2897 = vpack.c.b16 %v2896, %v2896
        %2898 = vrot.lane.b32.xlu0 %v2897, 112
        %v2899 = vpop.permute.xlu0 %2898
        %v2900 = vunpack.c.l.b16 %v2853
        %v2901 = vpack.c.b16 %v2900, %v2900
        %2902 = vrot.lane.b32.xlu0 %v2901, 16
        %v2903 = vpop.permute.xlu0 %2902
        %v2904 = vunpack.c.l.b16 %v2856
        %v2905 = vpack.c.b16 %v2904, %v2904
        %2906 = vrot.lane.b32.xlu0 %v2905, 32
        %v2907 = vpop.permute.xlu0 %2906
        %v2908 = vunpack.c.l.b16 %v2859
        %v2909 = vpack.c.b16 %v2908, %v2908
        %2910 = vrot.lane.b32.xlu0 %v2909, 48
        %v2911 = vpop.permute.xlu0 %2910
        %v2912 = vunpack.c.l.b16 %v2862
        %v2913 = vpack.c.b16 %v2912, %v2912
        %2914 = vrot.lane.b32.xlu0 %v2913, 64
        %v2915 = vpop.permute.xlu0 %2914
        %v2916 = vunpack.c.l.b16 %v2865
        %v2917 = vpack.c.b16 %v2916, %v2916
        %2918 = vrot.lane.b32.xlu0 %v2917, 80
        %v2919 = vpop.permute.xlu0 %2918
        %v2920 = vunpack.c.l.b16 %v2868
        %v2921 = vpack.c.b16 %v2920, %v2920
        %2922 = vrot.lane.b32.xlu0 %v2921, 96
        %v2923 = vpop.permute.xlu0 %2922
        %v2924 = vunpack.c.l.b16 %v2871
        %v2925 = vpack.c.b16 %v2924, %v2924
        %2926 = vrot.lane.b32.xlu0 %v2925, 112
        %v2927 = vpop.permute.xlu0 %2926
        %v2930 = vsel %vm481, %v2826, %v2875
        %v2932 = vsel %vm485, %v2930, %v2879
        %v2934 = vsel %vm488, %v2932, %v2883
        %v2936 = vsel %vm491, %v2934, %v2887
        %v2938 = vsel %vm494, %v2936, %v2891
        %v2940 = vsel %vm497, %v2938, %v2895
        %v2942 = vsel %vm500, %v2940, %v2899
        %v2945 = vsel %vm481, %v2850, %v2903
        %v2947 = vsel %vm485, %v2945, %v2907
        %v2949 = vsel %vm488, %v2947, %v2911
        %v2951 = vsel %vm491, %v2949, %v2915
        %v2953 = vsel %vm494, %v2951, %v2919
        %v2955 = vsel %vm497, %v2953, %v2923
        %v2957 = vsel %vm500, %v2955, %v2927
        %2958 = vrot.lane.b32.xlu0 %v2301, 126
        %v2959 = vpop.permute.xlu0 %2958
        %2960 = vrot.lane.b32.xlu0 %v2304, 126
        %v2961 = vpop.permute.xlu0 %2960
        %2962 = vrot.lane.b32.xlu0 %v2308, 126
        %v2963 = vpop.permute.xlu0 %2962
        %2964 = vrot.lane.b32.xlu0 %v2311, 126
        %v2965 = vpop.permute.xlu0 %2964
        %2966 = vrot.lane.b32.xlu0 %v2315, 126
        %v2967 = vpop.permute.xlu0 %2966
        %2968 = vrot.lane.b32.xlu0 %v2318, 126
        %v2969 = vpop.permute.xlu0 %2968
        %2970 = vrot.lane.b32.xlu0 %v2322, 126
        %v2971 = vpop.permute.xlu0 %2970
        %2972 = vrot.lane.b32.xlu0 %v2325, 126
        %v2973 = vpop.permute.xlu0 %2972
        %2974 = vrot.lane.b32.xlu0 %v2329, 126
        %v2975 = vpop.permute.xlu0 %2974
        %2976 = vrot.lane.b32.xlu0 %v2332, 126
        %v2977 = vpop.permute.xlu0 %2976
        %2978 = vrot.lane.b32.xlu0 %v2336, 126
        %v2979 = vpop.permute.xlu0 %2978
        %2980 = vrot.lane.b32.xlu0 %v2339, 126
        %v2981 = vpop.permute.xlu0 %2980
        %2982 = vrot.lane.b32.xlu0 %v2343, 126
        %v2983 = vpop.permute.xlu0 %2982
        %2984 = vrot.lane.b32.xlu0 %v2346, 126
        %v2985 = vpop.permute.xlu0 %2984
        %2986 = vrot.lane.b32.xlu0 %v2350, 126
        %v2987 = vpop.permute.xlu0 %2986
        %2988 = vrot.lane.b32.xlu0 %v2353, 126
        %v2989 = vpop.permute.xlu0 %2988
        %v3006 = vcombine.low %v2959, %v2975
        %v3008 = vunpack.c.l.s4 1983009808
        %v3009 = vunpack.c.0.s8 %v3008
        %v3010 = vlaneseq
        %v3011 = vshrl.u32 %v3010, 7
        %v3012 = vsub.s32 %v3009, %v3011
        %v3013 = vrot.slane %v3006, %v3012
        %v3014 = vcombine.low %v2967, %v2983
        %v3016 = vunpack.c.l.s4 1983009808
        %v3017 = vunpack.c.0.s8 %v3016
        %v3018 = vlaneseq
        %v3019 = vshrl.u32 %v3018, 7
        %v3020 = vsub.s32 %v3017, %v3019
        %v3021 = vrot.slane %v3014, %v3020
        %v3022 = vcombine.low %v3013, %v3021
        %v3023 = vcombine.high %v3013, %v3021
        %v3025 = vunpack.c.l.s4 1934713408
        %v3026 = vunpack.c.0.s8 %v3025
        %v3027 = vlaneseq
        %v3028 = vshrl.u32 %v3027, 7
        %v3029 = vsub.s32 %v3026, %v3028
        %v3030 = vrot.slane %v3022, %v3029
        %v3032 = vunpack.c.l.s4 1934713408
        %v3033 = vunpack.c.0.s8 %v3032
        %v3034 = vlaneseq
        %v3035 = vshrl.u32 %v3034, 7
        %v3036 = vsub.s32 %v3033, %v3035
        %v3037 = vrot.slane %v3023, %v3036
        %v3038 = vcombine.high %v3030, 0
        %v3039 = vcombine.high %v3037, 0
        %v3040 = vcombine.low %v2963, %v2979
        %v3042 = vunpack.c.l.s4 1983009808
        %v3043 = vunpack.c.0.s8 %v3042
        %v3044 = vlaneseq
        %v3045 = vshrl.u32 %v3044, 7
        %v3046 = vsub.s32 %v3043, %v3045
        %v3047 = vrot.slane %v3040, %v3046
        %v3048 = vcombine.low %v2971, %v2987
        %v3050 = vunpack.c.l.s4 1983009808
        %v3051 = vunpack.c.0.s8 %v3050
        %v3052 = vlaneseq
        %v3053 = vshrl.u32 %v3052, 7
        %v3054 = vsub.s32 %v3051, %v3053
        %v3055 = vrot.slane %v3048, %v3054
        %v3056 = vcombine.low %v3047, %v3055
        %v3057 = vcombine.high %v3047, %v3055
        %v3059 = vunpack.c.l.s4 1934713408
        %v3060 = vunpack.c.0.s8 %v3059
        %v3061 = vlaneseq
        %v3062 = vshrl.u32 %v3061, 7
        %v3063 = vsub.s32 %v3060, %v3062
        %v3064 = vrot.slane %v3056, %v3063
        %v3066 = vunpack.c.l.s4 1934713408
        %v3067 = vunpack.c.0.s8 %v3066
        %v3068 = vlaneseq
        %v3069 = vshrl.u32 %v3068, 7
        %v3070 = vsub.s32 %v3067, %v3069
        %v3071 = vrot.slane %v3057, %v3070
        %v3072 = vcombine.high %v3064, 0
        %v3073 = vcombine.high %v3071, 0
        %v3074 = vcombine.low %v2961, %v2977
        %v3076 = vunpack.c.l.s4 1983009808
        %v3077 = vunpack.c.0.s8 %v3076
        %v3078 = vlaneseq
        %v3079 = vshrl.u32 %v3078, 7
        %v3080 = vsub.s32 %v3077, %v3079
        %v3081 = vrot.slane %v3074, %v3080
        %v3082 = vcombine.low %v2969, %v2985
        %v3084 = vunpack.c.l.s4 1983009808
        %v3085 = vunpack.c.0.s8 %v3084
        %v3086 = vlaneseq
        %v3087 = vshrl.u32 %v3086, 7
        %v3088 = vsub.s32 %v3085, %v3087
        %v3089 = vrot.slane %v3082, %v3088
        %v3090 = vcombine.low %v3081, %v3089
        %v3091 = vcombine.high %v3081, %v3089
        %v3093 = vunpack.c.l.s4 1934713408
        %v3094 = vunpack.c.0.s8 %v3093
        %v3095 = vlaneseq
        %v3096 = vshrl.u32 %v3095, 7
        %v3097 = vsub.s32 %v3094, %v3096
        %v3098 = vrot.slane %v3090, %v3097
        %v3100 = vunpack.c.l.s4 1934713408
        %v3101 = vunpack.c.0.s8 %v3100
        %v3102 = vlaneseq
        %v3103 = vshrl.u32 %v3102, 7
        %v3104 = vsub.s32 %v3101, %v3103
        %v3105 = vrot.slane %v3091, %v3104
        %v3106 = vcombine.high %v3098, 0
        %v3107 = vcombine.high %v3105, 0
        %v3108 = vcombine.low %v2965, %v2981
        %v3110 = vunpack.c.l.s4 1983009808
        %v3111 = vunpack.c.0.s8 %v3110
        %v3112 = vlaneseq
        %v3113 = vshrl.u32 %v3112, 7
        %v3114 = vsub.s32 %v3111, %v3113
        %v3115 = vrot.slane %v3108, %v3114
        %v3116 = vcombine.low %v2973, %v2989
        %v3118 = vunpack.c.l.s4 1983009808
        %v3119 = vunpack.c.0.s8 %v3118
        %v3120 = vlaneseq
        %v3121 = vshrl.u32 %v3120, 7
        %v3122 = vsub.s32 %v3119, %v3121
        %v3123 = vrot.slane %v3116, %v3122
        %v3124 = vcombine.low %v3115, %v3123
        %v3125 = vcombine.high %v3115, %v3123
        %v3127 = vunpack.c.l.s4 1934713408
        %v3128 = vunpack.c.0.s8 %v3127
        %v3129 = vlaneseq
        %v3130 = vshrl.u32 %v3129, 7
        %v3131 = vsub.s32 %v3128, %v3130
        %v3132 = vrot.slane %v3124, %v3131
        %v3134 = vunpack.c.l.s4 1934713408
        %v3135 = vunpack.c.0.s8 %v3134
        %v3136 = vlaneseq
        %v3137 = vshrl.u32 %v3136, 7
        %v3138 = vsub.s32 %v3135, %v3137
        %v3139 = vrot.slane %v3125, %v3138
        %v3140 = vcombine.high %v3132, 0
        %v3141 = vcombine.high %v3139, 0
        %v3144 = vpack.i.b16 %v3064, %v3030
        %v3145 = vshrl.u32 %v3030, 16
        %v3146 = vshrl.u32 %v3064, 16
        %v3147 = vpack.i.b16 %v3146, %v3145
        %v3150 = vpack.i.b16 %v3072, %v3038
        %v3151 = vshrl.u32 %v3038, 16
        %v3152 = vshrl.u32 %v3072, 16
        %v3153 = vpack.i.b16 %v3152, %v3151
        %v3156 = vpack.i.b16 %v3071, %v3037
        %v3157 = vshrl.u32 %v3037, 16
        %v3158 = vshrl.u32 %v3071, 16
        %v3159 = vpack.i.b16 %v3158, %v3157
        %v3162 = vpack.i.b16 %v3073, %v3039
        %v3163 = vshrl.u32 %v3039, 16
        %v3164 = vshrl.u32 %v3073, 16
        %v3165 = vpack.i.b16 %v3164, %v3163
        %v3168 = vpack.i.b16 %v3132, %v3098
        %v3169 = vshrl.u32 %v3098, 16
        %v3170 = vshrl.u32 %v3132, 16
        %v3171 = vpack.i.b16 %v3170, %v3169
        %v3174 = vpack.i.b16 %v3140, %v3106
        %v3175 = vshrl.u32 %v3106, 16
        %v3176 = vshrl.u32 %v3140, 16
        %v3177 = vpack.i.b16 %v3176, %v3175
        %v3180 = vpack.i.b16 %v3139, %v3105
        %v3181 = vshrl.u32 %v3105, 16
        %v3182 = vshrl.u32 %v3139, 16
        %v3183 = vpack.i.b16 %v3182, %v3181
        %v3186 = vpack.i.b16 %v3141, %v3107
        %v3187 = vshrl.u32 %v3107, 16
        %v3188 = vshrl.u32 %v3141, 16
        %v3189 = vpack.i.b16 %v3188, %v3187
        %v3190 = vunpack.c.l.b16 %v3147
        %v3191 = vpack.c.b16 %v3190, %v3190
        %3192 = vrot.lane.b32.xlu0 %v3191, 16
        %v3193 = vpop.permute.xlu0 %3192
        %v3194 = vunpack.c.l.b16 %v3150
        %v3195 = vpack.c.b16 %v3194, %v3194
        %3196 = vrot.lane.b32.xlu0 %v3195, 32
        %v3197 = vpop.permute.xlu0 %3196
        %v3198 = vunpack.c.l.b16 %v3153
        %v3199 = vpack.c.b16 %v3198, %v3198
        %3200 = vrot.lane.b32.xlu0 %v3199, 48
        %v3201 = vpop.permute.xlu0 %3200
        %v3202 = vunpack.c.l.b16 %v3156
        %v3203 = vpack.c.b16 %v3202, %v3202
        %3204 = vrot.lane.b32.xlu0 %v3203, 64
        %v3205 = vpop.permute.xlu0 %3204
        %v3206 = vunpack.c.l.b16 %v3159
        %v3207 = vpack.c.b16 %v3206, %v3206
        %3208 = vrot.lane.b32.xlu0 %v3207, 80
        %v3209 = vpop.permute.xlu0 %3208
        %v3210 = vunpack.c.l.b16 %v3162
        %v3211 = vpack.c.b16 %v3210, %v3210
        %3212 = vrot.lane.b32.xlu0 %v3211, 96
        %v3213 = vpop.permute.xlu0 %3212
        %v3214 = vunpack.c.l.b16 %v3165
        %v3215 = vpack.c.b16 %v3214, %v3214
        %3216 = vrot.lane.b32.xlu0 %v3215, 112
        %v3217 = vpop.permute.xlu0 %3216
        %v3218 = vunpack.c.l.b16 %v3171
        %v3219 = vpack.c.b16 %v3218, %v3218
        %3220 = vrot.lane.b32.xlu0 %v3219, 16
        %v3221 = vpop.permute.xlu0 %3220
        %v3222 = vunpack.c.l.b16 %v3174
        %v3223 = vpack.c.b16 %v3222, %v3222
        %3224 = vrot.lane.b32.xlu0 %v3223, 32
        %v3225 = vpop.permute.xlu0 %3224
        %v3226 = vunpack.c.l.b16 %v3177
        %v3227 = vpack.c.b16 %v3226, %v3226
        %3228 = vrot.lane.b32.xlu0 %v3227, 48
        %v3229 = vpop.permute.xlu0 %3228
        %v3230 = vunpack.c.l.b16 %v3180
        %v3231 = vpack.c.b16 %v3230, %v3230
        %3232 = vrot.lane.b32.xlu0 %v3231, 64
        %v3233 = vpop.permute.xlu0 %3232
        %v3234 = vunpack.c.l.b16 %v3183
        %v3235 = vpack.c.b16 %v3234, %v3234
        %3236 = vrot.lane.b32.xlu0 %v3235, 80
        %v3237 = vpop.permute.xlu0 %3236
        %v3238 = vunpack.c.l.b16 %v3186
        %v3239 = vpack.c.b16 %v3238, %v3238
        %3240 = vrot.lane.b32.xlu0 %v3239, 96
        %v3241 = vpop.permute.xlu0 %3240
        %v3242 = vunpack.c.l.b16 %v3189
        %v3243 = vpack.c.b16 %v3242, %v3242
        %3244 = vrot.lane.b32.xlu0 %v3243, 112
        %v3245 = vpop.permute.xlu0 %3244
        %v3248 = vsel %vm481, %v3144, %v3193
        %v3250 = vsel %vm485, %v3248, %v3197
        %v3252 = vsel %vm488, %v3250, %v3201
        %v3254 = vsel %vm491, %v3252, %v3205
        %v3256 = vsel %vm494, %v3254, %v3209
        %v3258 = vsel %vm497, %v3256, %v3213
        %v3260 = vsel %vm500, %v3258, %v3217
        %v3263 = vsel %vm481, %v3168, %v3221
        %v3265 = vsel %vm485, %v3263, %v3225
        %v3267 = vsel %vm488, %v3265, %v3229
        %v3269 = vsel %vm491, %v3267, %v3233
        %v3271 = vsel %vm494, %v3269, %v3237
        %v3273 = vsel %vm497, %v3271, %v3241
        %v3275 = vsel %vm500, %v3273, %v3245
        %v3278 = vrot.slane %v836, 4
        %v3279 = vrot.slane %v851, 4
        %v3282 = vrot.slane %v1635, 4
        %v3283 = vrot.slane %v1650, 4
        %v3286 = vrot.slane %v2271, 4
        %v3287 = vrot.slane %v2286, 4
        %v3290 = vrot.slane %v2942, 4
        %v3291 = vrot.slane %v2957, 4
        %vm3292 = vcmask 1043456
        %v3294 = vsel %vm3292, %v502, %v3278
        %v3297 = vsel %vm3292, %v517, %v3279
        %v3300 = vsel %vm3292, %v1154, %v3282
        %v3303 = vsel %vm3292, %v1169, %v3283
        %v3306 = vsel %vm3292, %v1953, %v3286
        %v3309 = vsel %vm3292, %v1968, %v3287
        %v3312 = vsel %vm3292, %v2624, %v3290
        %v3315 = vsel %vm3292, %v2639, %v3291
        %v3317 = vld [vmem:[%s1] sm:$0xf]
        %v3318 = vld [vmem:[%s1 + $0x4] sm:$0xf]
        %v3319 = vld [vmem:[%s1 + $0x8] sm:$0xf]
        %v3320 = vld [vmem:[%s1 + $0xc] sm:$0xf]
        %v3321 = vld [vmem:[%s2] sm:$0xff]
        %v3322 = vld [vmem:[%s2 + $0x8] sm:$0xff]
        %v3323 = vld [vmem:[%s2 + $0x10] sm:$0xff]
        %v3324 = vld [vmem:[%s2 + $0x18] sm:$0xff]
        %3326 = vset.pattern.permute.xlu0 0
        %3327 = vperm.xlu0 %3326, %v3321
        %v3328 = vpop.permute.xlu0 %3327
        %3331 = vset.pattern.permute.xlu0 0
        %3332 = vperm.xlu0 %3331, %v3322
        %v3333 = vpop.permute.xlu0 %3332
        %3336 = vset.pattern.permute.xlu0 0
        %3337 = vperm.xlu0 %3336, %v3323
        %v3338 = vpop.permute.xlu0 %3337
        %3341 = vset.pattern.permute.xlu0 0
        %3342 = vperm.xlu0 %3341, %v3324
        %v3343 = vpop.permute.xlu0 %3342
        %v3349 = vunpack.c.l.b16 %v3317
        %v3350 = vunpack.c.l.b16 %v3318
        %v3351 = vunpack.c.l.b16 %v3319
        %v3352 = vunpack.c.l.b16 %v3320
        %v3353 = vpack.c.b16 %v3350, %v3349
        %v3354 = vpack.c.b16 %v3352, %v3351
        %vm3355 = vcmask 588800
        %v3357 = vsel %vm3355, %v3353, 0
        %v3360 = vsel %vm3355, %v3354, 0
        %v3362 = vsel %vm3292, %v3260, 0
        %v3364 = vsel %vm3292, %v3275, 0
        %3366 = vmatprep.subr.bf16.mxu0 %v3297
        %3367 = vmatpush1.bf16.msra.mxu0 %v3294
        %3368 = vmatprep.subr.bf16.mxu0 %v3303
        %3369 = vmatpush1.bf16.msra.mxu0 %v3300
        %3370 = vmatprep.subr.bf16.mxu0 %v3309
        %3371 = vmatpush1.bf16.msra.mxu0 %v3306
        %3372 = vmatprep.subr.bf16.mxu0 %v3315
        %3373 = vmatpush1.bf16.msra.mxu0 %v3312
        %3374 = vmatprep.subr.bf16.mxu0 %v3364
        %3375 = vmatpush1.bf16.msra.mxu0 %v3362
        %3376 = vmatprep.subr.bf16.mxu0 0
        %3377 = vmatpush1.bf16.msra.mxu0 0
        %3378 = vmatprep.subr.bf16.mxu0 0
        %3379 = vmatpush1.bf16.msra.mxu0 0
        %3380 = vmatprep.subr.bf16.mxu0 0
        %3381 = vmatpush1.bf16.msra.mxu0 0
        %3382 = vmatprep.subr.bf16.mxu0 0
        %3383 = vmatpush1.bf16.msra.mxu0 0
        %3384 = vmatprep.subr.bf16.mxu0 0
        %3385 = vmatpush1.bf16.msra.mxu0 0
        %3386 = vmatprep.subr.bf16.mxu0 0
        %3387 = vmatpush1.bf16.msra.mxu0 0
        %3388 = vmatprep.subr.bf16.mxu0 0
        %3389 = vmatpush1.bf16.msra.mxu0 0
        %3390 = vmatprep.subr.bf16.mxu0 0
        %3391 = vmatpush1.bf16.msra.mxu0 0
        %3392 = vmatprep.subr.bf16.mxu0 0
        %3393 = vmatpush1.bf16.msra.mxu0 0
        %3394 = vmatprep.subr.bf16.mxu0 0
        %3395 = vmatpush1.bf16.msra.mxu0 0
        %3396 = vmatprep.subr.bf16.mxu0 0
        %3397 = vmatpush1.bf16.msra.mxu0 0
        %3398 = vmatprep.mubr.bf16.mxu0 0
        %3399 = vmatmul.mubr.bf16.gmra.mrb[0].mxu0 %v3357
        %v3400 = vpop.f32.mrb[0].mxu0
        %v3401 = vadd.f32 %v3328, %v3400
        %v3402 = vpop.f32.mrb[0].mxu0
        %v3403 = vadd.f32 %v3328, %v3402
        %v3404 = vpop.f32.mrb[0].mxu0
        %v3405 = vadd.f32 %v3333, %v3404
        %v3406 = vpop.f32.mrb[0].mxu0
        %v3407 = vadd.f32 %v3333, %v3406
        %3408 = vmatprep.mubr.bf16.mxu0 0
        %3409 = vmatmul.mubr.bf16.gmra.mrb[0].mxu0 %v3360
        %v3410 = vpop.f32.mrb[0].mxu0
        %v3411 = vadd.f32 %v3338, %v3410
        %v3412 = vpop.f32.mrb[0].mxu0
        %v3413 = vadd.f32 %v3338, %v3412
        %v3414 = vpop.f32.mrb[0].mxu0
        %v3415 = vadd.f32 %v3343, %v3414
        %v3416 = vpop.f32.mrb[0].mxu0
        %v3417 = vadd.f32 %v3343, %v3416
        %3418 = vdwg.mxu0
        %v3419 = vmax.f32 %v3401, 0.0
        %v3420 = vmax.f32 %v3403, 0.0
        %v3421 = vmax.f32 %v3405, 0.0
        %v3422 = vmax.f32 %v3407, 0.0
        %v3423 = vmax.f32 %v3411, 0.0
        %v3424 = vmax.f32 %v3413, 0.0
        %v3425 = vmax.f32 %v3415, 0.0
        %v3426 = vmax.f32 %v3417, 0.0
        %v3427 = vld [vmem:[%s3] sm:$0xf]
        %v3428 = vld [vmem:[%s3 + $0x4] sm:$0xf]
        %v3429 = vpack.c.bf16 %v3421, %v3419
        %v3430 = vpack.c.bf16 %v3422, %v3420
        %v3431 = vpack.c.bf16 %v3425, %v3423
        %v3432 = vpack.c.bf16 %v3426, %v3424
        %v3435 = vunpack.c.l.b16 %v3427
        %v3436 = vunpack.c.l.b16 %v3428
        %v3437 = vpack.c.b16 %v3436, %v3435
        %v3439 = vsel %vm485, %v3437, 0
        %3441 = vmatprep.subr.bf16.mxu0 %v3430
        %3442 = vmatpush1.bf16.msra.mxu0 %v3429
        %3443 = vmatprep.subr.bf16.mxu0 %v3432
        %3444 = vmatpush1.bf16.msra.mxu0 %v3431
        %3445 = vmatprep.subr.bf16.mxu0 0
        %3446 = vmatpush1.bf16.msra.mxu0 0
        %3447 = vmatprep.subr.bf16.mxu0 0
        %3448 = vmatpush1.bf16.msra.mxu0 0
        %3449 = vmatprep.subr.bf16.mxu0 0
        %3450 = vmatpush1.bf16.msra.mxu0 0
        %3451 = vmatprep.subr.bf16.mxu0 0
        %3452 = vmatpush1.bf16.msra.mxu0 0
        %3453 = vmatprep.subr.bf16.mxu0 0
        %3454 = vmatpush1.bf16.msra.mxu0 0
        %3455 = vmatprep.subr.bf16.mxu0 0
        %3456 = vmatpush1.bf16.msra.mxu0 0
        %3457 = vmatprep.subr.bf16.mxu0 0
        %3458 = vmatpush1.bf16.msra.mxu0 0
        %3459 = vmatprep.subr.bf16.mxu0 0
        %3460 = vmatpush1.bf16.msra.mxu0 0
        %3461 = vmatprep.subr.bf16.mxu0 0
        %3462 = vmatpush1.bf16.msra.mxu0 0
        %3463 = vmatprep.subr.bf16.mxu0 0
        %3464 = vmatpush1.bf16.msra.mxu0 0
        %3465 = vmatprep.subr.bf16.mxu0 0
        %3466 = vmatpush1.bf16.msra.mxu0 0
        %3467 = vmatprep.subr.bf16.mxu0 0
        %3468 = vmatpush1.bf16.msra.mxu0 0
        %3469 = vmatprep.subr.bf16.mxu0 0
        %3470 = vmatpush1.bf16.msra.mxu0 0
        %3471 = vmatprep.subr.bf16.mxu0 0
        %3472 = vmatpush1.bf16.msra.mxu0 0
        %3473 = vmatprep.mubr.bf16.mxu0 0
        %3474 = vmatmul.mubr.bf16.gmra.mrb[0].mxu0 %v3439
        %v3475 = vpop.f32.mrb[0].mxu0
        %v3476 = vadd.f32 0.0, %v3475
        %v3477 = vpop.f32.mrb[0].mxu0
        %v3478 = vadd.f32 0.0, %v3477
        %v3479 = vpop.f32.mrb[0].mxu0
        %v3480 = vadd.f32 0.0, %v3479
        %v3481 = vpop.f32.mrb[0].mxu0
        %v3482 = vadd.f32 0.0, %v3481
        %3483 = vdwg.mxu0
        %3484 = vst [vmem:[%s204] sm:$0xff] %v3476
        %3485 = vst [vmem:[%s204 + $0x8] sm:$0xff] %v3478
        %3486 = vst [vmem:[%s204 + $0x10] sm:$0xff] %v3480
        %3487 = vst [vmem:[%s204 + $0x18] sm:$0xff] %v3482
        %s3488 = sand.u32 %s129, 1
        %s3489 = scalar_lea.sflag [#allocation3], %s3488
        %s3490 = sand.u32 %s129, 1
        %s3491 = smul.addr %s3490, 32
        %s3492 = scalar_lea.vmem [#allocation2], %s3491
        // Predicated region
        $region37: #{tpu_custom_call.1} parent=35 // pred_check
          %p3493 = pneg %p139
        $region38: #{tpu_custom_call.1} parent=35 // pred_check_branch
          %3495 = sbr.rel (%p3493) target = $region40
        $region39: #{tpu_custom_call.1} parent=35 // pred_region
          %s3496 = smul.u32 2, %s23
          %s3498 = ssub.s32 512, 512
          %3499 = vsyncadd %s3489, %s3498
          %s3500 = smul.addr %s22, 4
          %s3501 = sadd.s32 %s3496, %s3500
          %s3502 = smul.addr %s3501, 128
          %s3503 = scalar_lea.hbm %s4, %s3502
          %s3504 = sshll.u32 %s3492, 4
          %s3505 = int_to_ptr.vmem [resolvable:$true] %s3504
          %3510 = dma.vmem_to_hbm [thread:$0]  %s3505, 512, %s3503, %s3489, 256, 256, 16
        $region40: #{tpu_custom_call.1} parent=35 // pred_fallthru
          _
      $region36: #{tpu_custom_call.1} parent=5 // pred_fallthru
        _
      %p3511 = scmp.le.s32.totalorder 2, %s13
      // Predicated region
      $region41: #{tpu_custom_call.1} parent=5 // pred_check
        %p3512 = pneg %p3511
      $region42: #{tpu_custom_call.1} parent=5 // pred_check_branch
        %3514 = sbr.rel (%p3512) target = $region44
      $region43: #{tpu_custom_call.1} parent=5 // pred_region
        %s3515 = ssub.s32 %s13, 2
        // Predicated region
        $region45: #{tpu_custom_call.1} parent=43 // pred_check
          %p3516 = pneg %p145
        $region46: #{tpu_custom_call.1} parent=43 // pred_check_branch
          %3518 = sbr.rel (%p3516) target = $region48
        $region47: #{tpu_custom_call.1} parent=43 // pred_region
          %s3519 = sand.u32 %s130, 1
          %s3520 = scalar_lea.sflag [#allocation3], %s3519
          %s3521 = sand.u32 %s130, 1
          %s3522 = smul.addr %s3521, 32
          %s3523 = scalar_lea.vmem [#allocation2], %s3522
          %3524 = dma.done %s3520, 512
        $region48: #{tpu_custom_call.1} parent=43 // pred_fallthru
          _
      $region44: #{tpu_custom_call.1} parent=5 // pred_fallthru
        _
    $region6: #{tpu_custom_call.1} parent=1 // loop_footer
      %s17 = sadd.s32 1, %s13
    $region7: #{tpu_custom_call.1} parent=1 // loop_footer_branch
      %12 = sbr.rel target = $region3
    $region8: #{tpu_custom_call.1} parent=1 // loop_exit
      _
    %3525 = vsyncpa [#allocation3], 1
    %s3526 = scalar_lea.sflag [#allocation3], 1
    %3527 = vsyncpa %s3526, 1

</llo_original>
